<compile_context>
chip_gen: v6e
topology: v6e:2x2x1
jax: 0.10.0
libtpu: 0.0.40
codegen_flags: <defaults>
</compile_context>

<pallas_src>
import functools
import math

import jax
import jax.numpy as jnp
from jax import lax
from jax.experimental import pallas as pl
from jax.experimental.pallas import tpu as pltpu

_MXU_DTYPE = jnp.bfloat16   # MXU input dtype; accumulation is always f32.
_NEG_INF = -1e30            # matches reference (fp32 path uses -1e30)


# --------------------------------------------------------------------------
# Tiled Pallas linear kernel:  y = x @ W^T + b
#   x: [M, K] (f32), W: [N, K] (native nn.Linear layout), b: [1, N]
# --------------------------------------------------------------------------
def _linear_kernel(x_ref, w_ref, b_ref, o_ref, acc_ref):
    @pl.when(pl.program_id(2) == 0)
    def _init():
        acc_ref[...] = jnp.zeros_like(acc_ref)

    x = x_ref[...].astype(_MXU_DTYPE)            # (tm, tk)
    w = w_ref[...].astype(_MXU_DTYPE)            # (tn, tk)
    # Contract dim 1 of both operands -> (tm, tn); no transpose needed.
    acc_ref[...] += lax.dot_general(
        x, w, dimension_numbers=(((1,), (1,)), ((), ())),
        preferred_element_type=jnp.float32)

    @pl.when(pl.program_id(2) == pl.num_programs(2) - 1)
    def _done():
        o_ref[...] = (acc_ref[...] + b_ref[...]).astype(o_ref.dtype)


def _round_tile(dim, target, align):
    """Largest tile <= target that divides `dim` and is a multiple of `align`;
    falls back to the full dimension (always a legal block)."""
    if dim <= target:
        return dim
    t = (target // align) * align
    while t >= align:
        if dim % t == 0:
            return t
        t -= align
    return dim


def pallas_linear(x, w, b, *, tm=256, tn=256, tk=512):
    """x: (..., Cin); w: (Cout, Cin); b: (Cout,) -> (..., Cout) in f32."""
    orig_shape = x.shape
    cin = orig_shape[-1]
    cout = w.shape[0]
    x2 = x.reshape(-1, cin)
    m = x2.shape[0]

    tm = _round_tile(m, tm, 8)        # sublane dim of x / out blocks
    tn = _round_tile(cout, tn, 128)   # lane dim of out / bias, sublane of w
    tk = _round_tile(cin, tk, 128)    # lane dim of x / w blocks
    grid = (m // tm, cout // tn, cin // tk)

    y = pl.pallas_call(
        _linear_kernel,
        out_shape=jax.ShapeDtypeStruct((m, cout), jnp.float32),
        grid_spec=pltpu.PrefetchScalarGridSpec(
            num_scalar_prefetch=0,
            grid=grid,
            in_specs=[
                pl.BlockSpec((tm, tk), lambda i, j, k: (i, k)),
                pl.BlockSpec((tn, tk), lambda i, j, k: (j, k)),
                pl.BlockSpec((1, tn), lambda i, j, k: (0, j)),
            ],
            out_specs=pl.BlockSpec((tm, tn), lambda i, j, k: (i, j)),
            scratch_shapes=[pltpu.VMEM((tm, tn), jnp.float32)],
        ),
        compiler_params=pltpu.CompilerParams(
            dimension_semantics=("parallel", "parallel", "arbitrary"),
            vmem_limit_bytes=64 * 1024 * 1024,
        ),
    )(x2, w, b.reshape(1, cout))
    return y.reshape(*orig_shape[:-1], cout)


# --------------------------------------------------------------------------
# Pallas attention kernel: one grid step per batch, all heads fused.
#   q_ref : (T, H*dq)      kv_ref : (S, H*dq + H*dv)      m_ref : (T, S) int8
#   o_ref : (H, T, dv)  (contiguous -> host reinterpret to (T, H*dv))
# --------------------------------------------------------------------------
def _attn_kernel(q_ref, kv_ref, m_ref, o_ref, *,
                 num_heads, dq, dv, qk_channels, scale):
    valid = m_ref[...] != 0                                     # (T, S) bool

    for h in range(num_heads):                                  # static unroll
        q_h = q_ref[:, h * dq:(h + 1) * dq].astype(_MXU_DTYPE)  # (T, dq)
        k_h = kv_ref[:, h * dq:(h + 1) * dq].astype(_MXU_DTYPE) # (S, dq)
        v_h = kv_ref[:, qk_channels + h * dv:
                     qk_channels + (h + 1) * dv].astype(_MXU_DTYPE)  # (S, dv)

        # scores = q k^T * scale  (contract last dim of both; no transpose)
        s = lax.dot_general(
            q_h, k_h, dimension_numbers=(((1,), (1,)), ((), ())),
            preferred_element_type=jnp.float32) * scale          # (T, S) f32
        s = jnp.where(valid, s, _NEG_INF)

        # f32 softmax (normalization deferred to after P@V)
        s = s - jnp.max(s, axis=-1, keepdims=True)
        p = jnp.exp(s)
        denom = jnp.sum(p, axis=-1, keepdims=True)               # (T, 1)

        o_h = jnp.dot(p.astype(_MXU_DTYPE), v_h,
                      preferred_element_type=jnp.float32)        # (T, dv)
        o_ref[h, :, :] = o_h * pl.reciprocal(denom, approx=True)


def pallas_attend(q, kv, mask, *, num_heads, qk_channels, v_channels, scale):
    """q: [B,T,QK]; kv: [B,S,QK+V]; mask: [B,T,S] int8 -> [B,H,T,dv] f32."""
    B, T, _ = q.shape
    S = kv.shape[1]
    dq = qk_channels // num_heads
    dv = v_channels // num_heads

    kernel = functools.partial(
        _attn_kernel, num_heads=num_heads, dq=dq, dv=dv,
        qk_channels=qk_channels, scale=scale)

    return pl.pallas_call(
        kernel,
        out_shape=jax.ShapeDtypeStruct((B, num_heads, T, dv), jnp.float32),
        grid=(B,),
        in_specs=[
            pl.BlockSpec((None, T, qk_channels), lambda b: (b, 0, 0)),
            pl.BlockSpec((None, S, qk_channels + v_channels),
                         lambda b: (b, 0, 0)),
            pl.BlockSpec((None, T, S), lambda b: (b, 0, 0)),
        ],
        out_specs=pl.BlockSpec((None, num_heads, T, dv),
                               lambda b: (b, 0, 0, 0)),
        compiler_params=pltpu.CompilerParams(
            dimension_semantics=("parallel",),
            vmem_limit_bytes=64 * 1024 * 1024,
        ),
    )(q, kv, mask)


# --------------------------------------------------------------------------
# Parameter init (PyTorch nn.Linear default: U(-1/sqrt(fan_in), 1/sqrt(fan_in)))
# --------------------------------------------------------------------------
def _init_linear(key, out_c, in_c):
    kw, kb = jax.random.split(key)
    bound = 1.0 / math.sqrt(in_c)
    w = jax.random.uniform(kw, (out_c, in_c), jnp.float32, -bound, bound)
    b = jax.random.uniform(kb, (out_c,), jnp.float32, -bound, bound)
    return w, b


def init_attention_params(key, in_q_channels, in_kv_channels, qk_channels,
                          v_channels, output_channels):
    k1, k2, k3, k4 = jax.random.split(key, 4)
    wq, bq = _init_linear(k1, qk_channels, in_q_channels)
    wk, bk = _init_linear(k2, qk_channels, in_kv_channels)
    wv, bv = _init_linear(k3, v_channels, in_kv_channels)
    wo, bo = _init_linear(k4, output_channels, v_channels)
    return dict(wq=wq, bq=bq, wk=wk, bk=bk, wv=wv, bv=bv, wo=wo, bo=bo)


# --------------------------------------------------------------------------
# Forward pass matching Attention.forward
# --------------------------------------------------------------------------
@functools.partial(jax.jit, static_argnames=("num_heads",))
def attention_forward(params, inputs_q, inputs_kv, attention_mask=None,
                      *, num_heads):
    qk_channels = params["wq"].shape[0]
    v_channels = params["wv"].shape[0]

    # Q projection, and a fused K|V projection (single read of inputs_kv).
    q = pallas_linear(inputs_q, params["wq"], params["bq"])        # (B, T, QK)
    wkv = jnp.concatenate([params["wk"], params["wv"]], axis=0)    # (QK+V, Ckv)
    bkv = jnp.concatenate([params["bk"], params["bv"]], axis=0)
    kv = pallas_linear(inputs_kv, wkv, bkv)                        # (B, S, QK+V)

    B, T, _ = q.shape
    S = kv.shape[1]
    H = num_heads
    dq = qk_channels // H
    dv = v_channels // H

    if attention_mask is None:
        mask_i8 = jnp.ones((B, T, S), jnp.int8)
    else:
        mask_i8 = attention_mask.astype(jnp.int8)

    scale = 1.0 / math.sqrt(dq)
    summed = pallas_attend(q, kv, mask_i8, num_heads=H,
                           qk_channels=qk_channels, v_channels=v_channels,
                           scale=scale)                            # (B, H, T, dv)

    # Reference: summed.view(batch, q_indices, hiddens) on a contiguous
    # [b, h, t, d] tensor -> raw row-major reinterpret (free bitcast here).
    summed = summed.reshape(B, T, H * dv)

    if attention_mask is not None:
        wipe = jnp.all(attention_mask == 0, axis=-1, keepdims=True)  # (B, T, 1)
        summed = jnp.where(wipe, jnp.zeros_like(summed), summed)

    return pallas_linear(summed, params["wo"], params["bo"])


# --------------------------------------------------------------------------
if __name__ == "__main__":
    key = jax.random.PRNGKey(0)
    k_params, k_q, k_kv = jax.random.split(key, 3)

    # Small, module-consistent shapes.
    B = 2
    T_Q = 8          # query time
    T_KV = 16        # key/value time
    IN_Q_C = 32
    IN_KV_C = 32
    QK_C = 32        # out_qk_channels
    V_C = 32         # out_v_channels
    OUT_C = 32       # output_channels
    NUM_HEADS = 4

    params = init_attention_params(k_params, IN_Q_C, IN_KV_C, QK_C, V_C, OUT_C)

    inputs_q = jax.random.normal(k_q, (B, T_Q, IN_Q_C), jnp.float32)
    inputs_kv = jax.random.normal(k_kv, (B, T_KV, IN_KV_C), jnp.float32)

    # Boolean mask [B, T_Q, T_KV]: query t may attend to kv index s <= 2*t.
    s_idx = jnp.arange(T_KV)[None, None, :]
    t_idx = jnp.arange(T_Q)[None, :, None]
    attention_mask = jnp.broadcast_to(s_idx <= 2 * t_idx, (B, T_Q, T_KV))

    out = attention_forward(params, inputs_q, inputs_kv, attention_mask,
                            num_heads=NUM_HEADS)
    out = jax.block_until_ready(out)
    assert out.shape == (B, T_Q, OUT_C)
    assert bool(jnp.all(jnp.isfinite(out)))
    print("KERNEL_OK")
</pallas_src>

<mosaic_0001>
module attributes {stable_mosaic.version = 11 : i64} {
  func.func @_linear_kernel(%arg0: i32, %arg1: i32, %arg2: i32, %arg3: memref<32x32xf32, #tpu.memory_space<vmem>>, %arg4: memref<64x32xf32, #tpu.memory_space<vmem>>, %arg5: memref<1x64xf32, #tpu.memory_space<vmem>>, %arg6: memref<32x64xf32, #tpu.memory_space<vmem>>, %arg7: memref<32x64xf32, #tpu.memory_space<vmem>>) attributes {dimension_semantics = [#tpu.dimension_semantics<parallel>, #tpu.dimension_semantics<parallel>, #tpu.dimension_semantics<arbitrary>], iteration_bounds = array<i64: 1, 1, 1>, scalar_prefetch = 0 : i64, scratch_operands = 1 : i64, tpu.core_type = #tpu.core_type<tc>, window_params = [{transform_indices = @transform_0, window_bounds = array<i64: 32, 32>}, {transform_indices = @transform_1, window_bounds = array<i64: 64, 32>}, {transform_indices = @transform_2, window_bounds = array<i64: 1, 64>}, {transform_indices = @transform_3, window_bounds = array<i64: 32, 64>}]} {
    %c0_i32 = arith.constant 0 : i32
    %0 = arith.cmpi eq, %arg2, %c0_i32 : i32
    %1 = arith.extui %0 : i1 to i32
    %c0_i32_0 = arith.constant 0 : i32
    %2 = arith.cmpi ne, %1, %c0_i32_0 : i32
    scf.if %2 {
      %cst_10 = arith.constant 0.000000e+00 : f32
      %14 = vector.broadcast %cst_10 : f32 to vector<32x64xf32>
      %c0_11 = arith.constant 0 : index
      %c0_12 = arith.constant 0 : index
      %15 = vector.load %arg7[%c0_11, %c0_12] : memref<32x64xf32, #tpu.memory_space<vmem>>, vector<32x64xf32>
      tpu.vector_store %arg7[%c0_11, %c0_12], %14 {strides = array<i32>} : memref<32x64xf32, #tpu.memory_space<vmem>>, vector<32x64xf32>,
    } else {
    }
    %c0 = arith.constant 0 : index
    %c0_1 = arith.constant 0 : index
    %3 = vector.load %arg3[%c0, %c0_1] : memref<32x32xf32, #tpu.memory_space<vmem>>, vector<32x32xf32>
    %4 = arith.truncf %3 : vector<32x32xf32> to vector<32x32xbf16>
    %c0_2 = arith.constant 0 : index
    %c0_3 = arith.constant 0 : index
    %5 = vector.load %arg4[%c0_2, %c0_3] : memref<64x32xf32, #tpu.memory_space<vmem>>, vector<64x32xf32>
    %6 = arith.truncf %5 : vector<64x32xf32> to vector<64x32xbf16>
    %c0_4 = arith.constant 0 : index
    %c0_5 = arith.constant 0 : index
    %7 = vector.load %arg7[%c0_4, %c0_5] : memref<32x64xf32, #tpu.memory_space<vmem>>, vector<32x64xf32>
    %cst = arith.constant dense<0.000000e+00> : vector<32x64xf32>
    %8 = tpu.matmul %4, %6, %cst {dimension_numbers = #tpu.dot_dimension_numbers<[1], [1], [0], [0], [0, 0, 1, 0], [], []>} : vector<32x32xbf16>, vector<64x32xbf16>, vector<32x64xf32> -> vector<32x64xf32>
    %9 = arith.addf %7, %8 : vector<32x64xf32>
    %c0_6 = arith.constant 0 : index
    %c0_7 = arith.constant 0 : index
    %10 = vector.load %arg7[%c0_6, %c0_7] : memref<32x64xf32, #tpu.memory_space<vmem>>, vector<32x64xf32>
    tpu.vector_store %arg7[%c0_6, %c0_7], %9 {strides = array<i32>} : memref<32x64xf32, #tpu.memory_space<vmem>>, vector<32x64xf32>,
    %c0_i32_8 = arith.constant 0 : i32
    %11 = arith.cmpi eq, %arg2, %c0_i32_8 : i32
    %12 = arith.extui %11 : i1 to i32
    %c0_i32_9 = arith.constant 0 : i32
    %13 = arith.cmpi ne, %12, %c0_i32_9 : i32
    scf.if %13 {
      %c0_10 = arith.constant 0 : index
      %c0_11 = arith.constant 0 : index
      %14 = vector.load %arg7[%c0_10, %c0_11] : memref<32x64xf32, #tpu.memory_space<vmem>>, vector<32x64xf32>
      %c0_12 = arith.constant 0 : index
      %c0_13 = arith.constant 0 : index
      %15 = vector.load %arg5[%c0_12, %c0_13] : memref<1x64xf32, #tpu.memory_space<vmem>>, vector<1x64xf32>
      %16 = vector.broadcast %15 : vector<1x64xf32> to vector<32x64xf32>
      %17 = arith.addf %14, %16 : vector<32x64xf32>
      %c0_14 = arith.constant 0 : index
      %c0_15 = arith.constant 0 : index
      %18 = vector.load %arg6[%c0_14, %c0_15] : memref<32x64xf32, #tpu.memory_space<vmem>>, vector<32x64xf32>
      tpu.vector_store %arg6[%c0_14, %c0_15], %17 {strides = array<i32>} : memref<32x64xf32, #tpu.memory_space<vmem>>, vector<32x64xf32>,
    } else {
    }
    return
  }
  func.func @transform_0(%arg0: i32, %arg1: i32, %arg2: i32) -> (i32, i32) {
    %c0_i32 = arith.constant 0 : i32
    return %arg0, %arg2 : i32, i32
  }
  func.func @transform_1(%arg0: i32, %arg1: i32, %arg2: i32) -> (i32, i32) {
    %c0_i32 = arith.constant 0 : i32
    return %arg1, %arg2 : i32, i32
  }
  func.func @transform_2(%arg0: i32, %arg1: i32, %arg2: i32) -> (i32, i32) {
    %c0_i32 = arith.constant 0 : i32
    %c0_i32_0 = arith.constant 0 : i32
    return %c0_i32, %arg1 : i32, i32
  }
  func.func @transform_3(%arg0: i32, %arg1: i32, %arg2: i32) -> (i32, i32) {
    %c0_i32 = arith.constant 0 : i32
    return %arg0, %arg1 : i32, i32
  }
}

module attributes {stable_mosaic.version = 11 : i64} {
  func.func @_linear_kernel(%arg0: i32, %arg1: i32, %arg2: i32, %arg3: memref<16x32xf32, #tpu.memory_space<vmem>>, %arg4: memref<32x32xf32, #tpu.memory_space<vmem>>, %arg5: memref<1x32xf32, #tpu.memory_space<vmem>>, %arg6: memref<16x32xf32, #tpu.memory_space<vmem>>, %arg7: memref<16x32xf32, #tpu.memory_space<vmem>>) attributes {dimension_semantics = [#tpu.dimension_semantics<parallel>, #tpu.dimension_semantics<parallel>, #tpu.dimension_semantics<arbitrary>], iteration_bounds = array<i64: 1, 1, 1>, scalar_prefetch = 0 : i64, scratch_operands = 1 : i64, tpu.core_type = #tpu.core_type<tc>, window_params = [{transform_indices = @transform_0, window_bounds = array<i64: 16, 32>}, {transform_indices = @transform_1, window_bounds = array<i64: 32, 32>}, {transform_indices = @transform_2, window_bounds = array<i64: 1, 32>}, {transform_indices = @transform_3, window_bounds = array<i64: 16, 32>}]} {
    %c0_i32 = arith.constant 0 : i32
    %0 = arith.cmpi eq, %arg2, %c0_i32 : i32
    %1 = arith.extui %0 : i1 to i32
    %c0_i32_0 = arith.constant 0 : i32
    %2 = arith.cmpi ne, %1, %c0_i32_0 : i32
    scf.if %2 {
      %cst_10 = arith.constant 0.000000e+00 : f32
      %14 = vector.broadcast %cst_10 : f32 to vector<16x32xf32>
      %c0_11 = arith.constant 0 : index
      %c0_12 = arith.constant 0 : index
      %15 = vector.load %arg7[%c0_11, %c0_12] : memref<16x32xf32, #tpu.memory_space<vmem>>, vector<16x32xf32>
      tpu.vector_store %arg7[%c0_11, %c0_12], %14 {strides = array<i32>} : memref<16x32xf32, #tpu.memory_space<vmem>>, vector<16x32xf32>,
    } else {
    }
    %c0 = arith.constant 0 : index
    %c0_1 = arith.constant 0 : index
    %3 = vector.load %arg3[%c0, %c0_1] : memref<16x32xf32, #tpu.memory_space<vmem>>, vector<16x32xf32>
    %4 = arith.truncf %3 : vector<16x32xf32> to vector<16x32xbf16>
    %c0_2 = arith.constant 0 : index
    %c0_3 = arith.constant 0 : index
    %5 = vector.load %arg4[%c0_2, %c0_3] : memref<32x32xf32, #tpu.memory_space<vmem>>, vector<32x32xf32>
    %6 = arith.truncf %5 : vector<32x32xf32> to vector<32x32xbf16>
    %c0_4 = arith.constant 0 : index
    %c0_5 = arith.constant 0 : index
    %7 = vector.load %arg7[%c0_4, %c0_5] : memref<16x32xf32, #tpu.memory_space<vmem>>, vector<16x32xf32>
    %cst = arith.constant dense<0.000000e+00> : vector<16x32xf32>
    %8 = tpu.matmul %4, %6, %cst {dimension_numbers = #tpu.dot_dimension_numbers<[1], [1], [0], [0], [0, 0, 1, 0], [], []>} : vector<16x32xbf16>, vector<32x32xbf16>, vector<16x32xf32> -> vector<16x32xf32>
    %9 = arith.addf %7, %8 : vector<16x32xf32>
    %c0_6 = arith.constant 0 : index
    %c0_7 = arith.constant 0 : index
    %10 = vector.load %arg7[%c0_6, %c0_7] : memref<16x32xf32, #tpu.memory_space<vmem>>, vector<16x32xf32>
    tpu.vector_store %arg7[%c0_6, %c0_7], %9 {strides = array<i32>} : memref<16x32xf32, #tpu.memory_space<vmem>>, vector<16x32xf32>,
    %c0_i32_8 = arith.constant 0 : i32
    %11 = arith.cmpi eq, %arg2, %c0_i32_8 : i32
    %12 = arith.extui %11 : i1 to i32
    %c0_i32_9 = arith.constant 0 : i32
    %13 = arith.cmpi ne, %12, %c0_i32_9 : i32
    scf.if %13 {
      %c0_10 = arith.constant 0 : index
      %c0_11 = arith.constant 0 : index
      %14 = vector.load %arg7[%c0_10, %c0_11] : memref<16x32xf32, #tpu.memory_space<vmem>>, vector<16x32xf32>
      %c0_12 = arith.constant 0 : index
      %c0_13 = arith.constant 0 : index
      %15 = vector.load %arg5[%c0_12, %c0_13] : memref<1x32xf32, #tpu.memory_space<vmem>>, vector<1x32xf32>
      %16 = vector.broadcast %15 : vector<1x32xf32> to vector<16x32xf32>
      %17 = arith.addf %14, %16 : vector<16x32xf32>
      %c0_14 = arith.constant 0 : index
      %c0_15 = arith.constant 0 : index
      %18 = vector.load %arg6[%c0_14, %c0_15] : memref<16x32xf32, #tpu.memory_space<vmem>>, vector<16x32xf32>
      tpu.vector_store %arg6[%c0_14, %c0_15], %17 {strides = array<i32>} : memref<16x32xf32, #tpu.memory_space<vmem>>, vector<16x32xf32>,
    } else {
    }
    return
  }
  func.func @transform_0(%arg0: i32, %arg1: i32, %arg2: i32) -> (i32, i32) {
    %c0_i32 = arith.constant 0 : i32
    return %arg0, %arg2 : i32, i32
  }
  func.func @transform_1(%arg0: i32, %arg1: i32, %arg2: i32) -> (i32, i32) {
    %c0_i32 = arith.constant 0 : i32
    return %arg1, %arg2 : i32, i32
  }
  func.func @transform_2(%arg0: i32, %arg1: i32, %arg2: i32) -> (i32, i32) {
    %c0_i32 = arith.constant 0 : i32
    %c0_i32_0 = arith.constant 0 : i32
    return %c0_i32, %arg1 : i32, i32
  }
  func.func @transform_3(%arg0: i32, %arg1: i32, %arg2: i32) -> (i32, i32) {
    %c0_i32 = arith.constant 0 : i32
    return %arg0, %arg1 : i32, i32
  }
}

module attributes {stable_mosaic.version = 11 : i64} {
  func.func @_attn_kernel(%arg0: i32, %arg1: memref<1x8x32xf32, #tpu.memory_space<vmem>>, %arg2: memref<1x16x64xf32, #tpu.memory_space<vmem>>, %arg3: memref<1x8x16xi8, #tpu.memory_space<vmem>>, %arg4: memref<1x4x8x8xf32, #tpu.memory_space<vmem>>) attributes {dimension_semantics = [#tpu.dimension_semantics<parallel>], iteration_bounds = array<i64: 2>, scalar_prefetch = 0 : i64, scratch_operands = 0 : i64, tpu.core_type = #tpu.core_type<tc>, window_params = [{transform_indices = @transform_0, window_bounds = array<i64: 1, 8, 32>}, {transform_indices = @transform_1, window_bounds = array<i64: 1, 16, 64>}, {transform_indices = @transform_2, window_bounds = array<i64: 1, 8, 16>}, {transform_indices = @transform_3, window_bounds = array<i64: 1, 4, 8, 8>}]} {
    %c0 = arith.constant 0 : index
    %c0_0 = arith.constant 0 : index
    %c0_1 = arith.constant 0 : index
    %0 = vector.load %arg3[%c0, %c0_0, %c0_1] : memref<1x8x16xi8, #tpu.memory_space<vmem>>, vector<1x8x16xi8>
    %1 = vector.shape_cast %0 : vector<1x8x16xi8> to vector<8x16xi8>
    %c0_i8 = arith.constant 0 : i8
    %2 = vector.broadcast %c0_i8 : i8 to vector<8x16xi8>
    %3 = arith.cmpi ne, %1, %2 : vector<8x16xi8>
    %c0_2 = arith.constant 0 : index
    %c0_3 = arith.constant 0 : index
    %c0_4 = arith.constant 0 : index
    %4 = vector.load %arg1[%c0_2, %c0_3, %c0_4] : memref<1x8x32xf32, #tpu.memory_space<vmem>>, vector<1x8x8xf32>
    %5 = vector.shape_cast %4 : vector<1x8x8xf32> to vector<8x8xf32>
    %6 = arith.truncf %5 : vector<8x8xf32> to vector<8x8xbf16>
    %c0_5 = arith.constant 0 : index
    %c0_6 = arith.constant 0 : index
    %c0_7 = arith.constant 0 : index
    %7 = vector.load %arg2[%c0_5, %c0_6, %c0_7] : memref<1x16x64xf32, #tpu.memory_space<vmem>>, vector<1x16x8xf32>
    %8 = vector.shape_cast %7 : vector<1x16x8xf32> to vector<16x8xf32>
    %9 = arith.truncf %8 : vector<16x8xf32> to vector<16x8xbf16>
    %c0_8 = arith.constant 0 : index
    %c0_9 = arith.constant 0 : index
    %c32 = arith.constant 32 : index
    %10 = vector.load %arg2[%c0_8, %c0_9, %c32] : memref<1x16x64xf32, #tpu.memory_space<vmem>>, vector<1x16x8xf32>
    %11 = vector.shape_cast %10 : vector<1x16x8xf32> to vector<16x8xf32>
    %12 = arith.truncf %11 : vector<16x8xf32> to vector<16x8xbf16>
    %cst = arith.constant dense<0.000000e+00> : vector<8x16xf32>
    %13 = tpu.matmul %6, %9, %cst {dimension_numbers = #tpu.dot_dimension_numbers<[1], [1], [0], [0], [0, 0, 1, 0], [], []>} : vector<8x8xbf16>, vector<16x8xbf16>, vector<8x16xf32> -> vector<8x16xf32>
    %cst_10 = arith.constant 0.353553385 : f32
    %14 = vector.broadcast %cst_10 : f32 to vector<8x16xf32>
    %15 = arith.mulf %13, %14 : vector<8x16xf32>
    %cst_11 = arith.constant -1.000000e+30 : f32
    %16 = vector.broadcast %cst_11 : f32 to vector<8x16xf32>
    %17 = arith.select %3, %15, %16 : vector<8x16xi1>, vector<8x16xf32>
    %cst_12 = arith.constant dense<0xFF800000> : vector<8xf32>
    %18 = vector.multi_reduction <maximumf>, %17, %cst_12 [1] : vector<8x16xf32> to vector<8xf32>
    %19 = vector.shape_cast %18 : vector<8xf32> to vector<8x1xf32>
    %20 = vector.broadcast %19 : vector<8x1xf32> to vector<8x16xf32>
    %21 = arith.subf %17, %20 : vector<8x16xf32>
    %22 = math.exp %21 : vector<8x16xf32>
    %cst_13 = arith.constant dense<0.000000e+00> : vector<8xf32>
    %23 = vector.multi_reduction <add>, %22, %cst_13 [1] : vector<8x16xf32> to vector<8xf32>
    %24 = vector.shape_cast %23 : vector<8xf32> to vector<8x1xf32>
    %25 = arith.truncf %22 : vector<8x16xf32> to vector<8x16xbf16>
    %cst_14 = arith.constant dense<0.000000e+00> : vector<8x8xf32>
    %26 = tpu.matmul %25, %12, %cst_14 {dimension_numbers = #tpu.dot_dimension_numbers<[1], [0], [0], [1], [0, 0, 1, 1], [], []>} : vector<8x16xbf16>, vector<16x8xbf16>, vector<8x8xf32> -> vector<8x8xf32>
    %27 = tpu.reciprocal %24 {approx = true} : vector<8x1xf32> -> vector<8x1xf32>
    %28 = vector.broadcast %27 : vector<8x1xf32> to vector<8x8xf32>
    %29 = arith.mulf %26, %28 : vector<8x8xf32>
    %c0_15 = arith.constant 0 : index
    %c0_16 = arith.constant 0 : index
    %c0_17 = arith.constant 0 : index
    %c0_18 = arith.constant 0 : index
    %30 = vector.load %arg4[%c0_15, %c0_16, %c0_17, %c0_18] : memref<1x4x8x8xf32, #tpu.memory_space<vmem>>, vector<1x1x8x8xf32>
    %31 = vector.shape_cast %30 : vector<1x1x8x8xf32> to vector<8x8xf32>
    %32 = vector.shape_cast %29 : vector<8x8xf32> to vector<1x1x8x8xf32>
    tpu.vector_store %arg4[%c0_15, %c0_16, %c0_17, %c0_18], %32 {strides = array<i32>} : memref<1x4x8x8xf32, #tpu.memory_space<vmem>>, vector<1x1x8x8xf32>,
    %c0_19 = arith.constant 0 : index
    %c0_20 = arith.constant 0 : index
    %c8 = arith.constant 8 : index
    %33 = vector.load %arg1[%c0_19, %c0_20, %c8] : memref<1x8x32xf32, #tpu.memory_space<vmem>>, vector<1x8x8xf32>
    %34 = vector.shape_cast %33 : vector<1x8x8xf32> to vector<8x8xf32>
    %35 = arith.truncf %34 : vector<8x8xf32> to vector<8x8xbf16>
    %c0_21 = arith.constant 0 : index
    %c0_22 = arith.constant 0 : index
    %c8_23 = arith.constant 8 : index
    %36 = vector.load %arg2[%c0_21, %c0_22, %c8_23] : memref<1x16x64xf32, #tpu.memory_space<vmem>>, vector<1x16x8xf32>
    %37 = vector.shape_cast %36 : vector<1x16x8xf32> to vector<16x8xf32>
    %38 = arith.truncf %37 : vector<16x8xf32> to vector<16x8xbf16>
    %c0_24 = arith.constant 0 : index
    %c0_25 = arith.constant 0 : index
    %c40 = arith.constant 40 : index
    %39 = vector.load %arg2[%c0_24, %c0_25, %c40] : memref<1x16x64xf32, #tpu.memory_space<vmem>>, vector<1x16x8xf32>
    %40 = vector.shape_cast %39 : vector<1x16x8xf32> to vector<16x8xf32>
    %41 = arith.truncf %40 : vector<16x8xf32> to vector<16x8xbf16>
    %cst_26 = arith.constant dense<0.000000e+00> : vector<8x16xf32>
    %42 = tpu.matmul %35, %38, %cst_26 {dimension_numbers = #tpu.dot_dimension_numbers<[1], [1], [0], [0], [0, 0, 1, 0], [], []>} : vector<8x8xbf16>, vector<16x8xbf16>, vector<8x16xf32> -> vector<8x16xf32>
    %cst_27 = arith.constant 0.353553385 : f32
    %43 = vector.broadcast %cst_27 : f32 to vector<8x16xf32>
    %44 = arith.mulf %42, %43 : vector<8x16xf32>
    %cst_28 = arith.constant -1.000000e+30 : f32
    %45 = vector.broadcast %cst_28 : f32 to vector<8x16xf32>
    %46 = arith.select %3, %44, %45 : vector<8x16xi1>, vector<8x16xf32>
    %cst_29 = arith.constant dense<0xFF800000> : vector<8xf32>
    %47 = vector.multi_reduction <maximumf>, %46, %cst_29 [1] : vector<8x16xf32> to vector<8xf32>
    %48 = vector.shape_cast %47 : vector<8xf32> to vector<8x1xf32>
    %49 = vector.broadcast %48 : vector<8x1xf32> to vector<8x16xf32>
    %50 = arith.subf %46, %49 : vector<8x16xf32>
    %51 = math.exp %50 : vector<8x16xf32>
    %cst_30 = arith.constant dense<0.000000e+00> : vector<8xf32>
    %52 = vector.multi_reduction <add>, %51, %cst_30 [1] : vector<8x16xf32> to vector<8xf32>
    %53 = vector.shape_cast %52 : vector<8xf32> to vector<8x1xf32>
    %54 = arith.truncf %51 : vector<8x16xf32> to vector<8x16xbf16>
    %cst_31 = arith.constant dense<0.000000e+00> : vector<8x8xf32>
    %55 = tpu.matmul %54, %41, %cst_31 {dimension_numbers = #tpu.dot_dimension_numbers<[1], [0], [0], [1], [0, 0, 1, 1], [], []>} : vector<8x16xbf16>, vector<16x8xbf16>, vector<8x8xf32> -> vector<8x8xf32>
    %56 = tpu.reciprocal %53 {approx = true} : vector<8x1xf32> -> vector<8x1xf32>
    %57 = vector.broadcast %56 : vector<8x1xf32> to vector<8x8xf32>
    %58 = arith.mulf %55, %57 : vector<8x8xf32>
    %c0_32 = arith.constant 0 : index
    %c1 = arith.constant 1 : index
    %c0_33 = arith.constant 0 : index
    %c0_34 = arith.constant 0 : index
    %59 = vector.load %arg4[%c0_32, %c1, %c0_33, %c0_34] : memref<1x4x8x8xf32, #tpu.memory_space<vmem>>, vector<1x1x8x8xf32>
    %60 = vector.shape_cast %59 : vector<1x1x8x8xf32> to vector<8x8xf32>
    %61 = vector.shape_cast %58 : vector<8x8xf32> to vector<1x1x8x8xf32>
    tpu.vector_store %arg4[%c0_32, %c1, %c0_33, %c0_34], %61 {strides = array<i32>} : memref<1x4x8x8xf32, #tpu.memory_space<vmem>>, vector<1x1x8x8xf32>,
    %c0_35 = arith.constant 0 : index
    %c0_36 = arith.constant 0 : index
    %c16 = arith.constant 16 : index
    %62 = vector.load %arg1[%c0_35, %c0_36, %c16] : memref<1x8x32xf32, #tpu.memory_space<vmem>>, vector<1x8x8xf32>
    %63 = vector.shape_cast %62 : vector<1x8x8xf32> to vector<8x8xf32>
    %64 = arith.truncf %63 : vector<8x8xf32> to vector<8x8xbf16>
    %c0_37 = arith.constant 0 : index
    %c0_38 = arith.constant 0 : index
    %c16_39 = arith.constant 16 : index
    %65 = vector.load %arg2[%c0_37, %c0_38, %c16_39] : memref<1x16x64xf32, #tpu.memory_space<vmem>>, vector<1x16x8xf32>
    %66 = vector.shape_cast %65 : vector<1x16x8xf32> to vector<16x8xf32>
    %67 = arith.truncf %66 : vector<16x8xf32> to vector<16x8xbf16>
    %c0_40 = arith.constant 0 : index
    %c0_41 = arith.constant 0 : index
    %c48 = arith.constant 48 : index
    %68 = vector.load %arg2[%c0_40, %c0_41, %c48] : memref<1x16x64xf32, #tpu.memory_space<vmem>>, vector<1x16x8xf32>
    %69 = vector.shape_cast %68 : vector<1x16x8xf32> to vector<16x8xf32>
    %70 = arith.truncf %69 : vector<16x8xf32> to vector<16x8xbf16>
    %cst_42 = arith.constant dense<0.000000e+00> : vector<8x16xf32>
    %71 = tpu.matmul %64, %67, %cst_42 {dimension_numbers = #tpu.dot_dimension_numbers<[1], [1], [0], [0], [0, 0, 1, 0], [], []>} : vector<8x8xbf16>, vector<16x8xbf16>, vector<8x16xf32> -> vector<8x16xf32>
    %cst_43 = arith.constant 0.353553385 : f32
    %72 = vector.broadcast %cst_43 : f32 to vector<8x16xf32>
    %73 = arith.mulf %71, %72 : vector<8x16xf32>
    %cst_44 = arith.constant -1.000000e+30 : f32
    %74 = vector.broadcast %cst_44 : f32 to vector<8x16xf32>
    %75 = arith.select %3, %73, %74 : vector<8x16xi1>, vector<8x16xf32>
    %cst_45 = arith.constant dense<0xFF800000> : vector<8xf32>
    %76 = vector.multi_reduction <maximumf>, %75, %cst_45 [1] : vector<8x16xf32> to vector<8xf32>
    %77 = vector.shape_cast %76 : vector<8xf32> to vector<8x1xf32>
    %78 = vector.broadcast %77 : vector<8x1xf32> to vector<8x16xf32>
    %79 = arith.subf %75, %78 : vector<8x16xf32>
    %80 = math.exp %79 : vector<8x16xf32>
    %cst_46 = arith.constant dense<0.000000e+00> : vector<8xf32>
    %81 = vector.multi_reduction <add>, %80, %cst_46 [1] : vector<8x16xf32> to vector<8xf32>
    %82 = vector.shape_cast %81 : vector<8xf32> to vector<8x1xf32>
    %83 = arith.truncf %80 : vector<8x16xf32> to vector<8x16xbf16>
    %cst_47 = arith.constant dense<0.000000e+00> : vector<8x8xf32>
    %84 = tpu.matmul %83, %70, %cst_47 {dimension_numbers = #tpu.dot_dimension_numbers<[1], [0], [0], [1], [0, 0, 1, 1], [], []>} : vector<8x16xbf16>, vector<16x8xbf16>, vector<8x8xf32> -> vector<8x8xf32>
    %85 = tpu.reciprocal %82 {approx = true} : vector<8x1xf32> -> vector<8x1xf32>
    %86 = vector.broadcast %85 : vector<8x1xf32> to vector<8x8xf32>
    %87 = arith.mulf %84, %86 : vector<8x8xf32>
    %c0_48 = arith.constant 0 : index
    %c2 = arith.constant 2 : index
    %c0_49 = arith.constant 0 : index
    %c0_50 = arith.constant 0 : index
    %88 = vector.load %arg4[%c0_48, %c2, %c0_49, %c0_50] : memref<1x4x8x8xf32, #tpu.memory_space<vmem>>, vector<1x1x8x8xf32>
    %89 = vector.shape_cast %88 : vector<1x1x8x8xf32> to vector<8x8xf32>
    %90 = vector.shape_cast %87 : vector<8x8xf32> to vector<1x1x8x8xf32>
    tpu.vector_store %arg4[%c0_48, %c2, %c0_49, %c0_50], %90 {strides = array<i32>} : memref<1x4x8x8xf32, #tpu.memory_space<vmem>>, vector<1x1x8x8xf32>,
    %c0_51 = arith.constant 0 : index
    %c0_52 = arith.constant 0 : index
    %c24 = arith.constant 24 : index
    %91 = vector.load %arg1[%c0_51, %c0_52, %c24] : memref<1x8x32xf32, #tpu.memory_space<vmem>>, vector<1x8x8xf32>
    %92 = vector.shape_cast %91 : vector<1x8x8xf32> to vector<8x8xf32>
    %93 = arith.truncf %92 : vector<8x8xf32> to vector<8x8xbf16>
    %c0_53 = arith.constant 0 : index
    %c0_54 = arith.constant 0 : index
    %c24_55 = arith.constant 24 : index
    %94 = vector.load %arg2[%c0_53, %c0_54, %c24_55] : memref<1x16x64xf32, #tpu.memory_space<vmem>>, vector<1x16x8xf32>
    %95 = vector.shape_cast %94 : vector<1x16x8xf32> to vector<16x8xf32>
    %96 = arith.truncf %95 : vector<16x8xf32> to vector<16x8xbf16>
    %c0_56 = arith.constant 0 : index
    %c0_57 = arith.constant 0 : index
    %c56 = arith.constant 56 : index
    %97 = vector.load %arg2[%c0_56, %c0_57, %c56] : memref<1x16x64xf32, #tpu.memory_space<vmem>>, vector<1x16x8xf32>
    %98 = vector.shape_cast %97 : vector<1x16x8xf32> to vector<16x8xf32>
    %99 = arith.truncf %98 : vector<16x8xf32> to vector<16x8xbf16>
    %cst_58 = arith.constant dense<0.000000e+00> : vector<8x16xf32>
    %100 = tpu.matmul %93, %96, %cst_58 {dimension_numbers = #tpu.dot_dimension_numbers<[1], [1], [0], [0], [0, 0, 1, 0], [], []>} : vector<8x8xbf16>, vector<16x8xbf16>, vector<8x16xf32> -> vector<8x16xf32>
    %cst_59 = arith.constant 0.353553385 : f32
    %101 = vector.broadcast %cst_59 : f32 to vector<8x16xf32>
    %102 = arith.mulf %100, %101 : vector<8x16xf32>
    %cst_60 = arith.constant -1.000000e+30 : f32
    %103 = vector.broadcast %cst_60 : f32 to vector<8x16xf32>
    %104 = arith.select %3, %102, %103 : vector<8x16xi1>, vector<8x16xf32>
    %cst_61 = arith.constant dense<0xFF800000> : vector<8xf32>
    %105 = vector.multi_reduction <maximumf>, %104, %cst_61 [1] : vector<8x16xf32> to vector<8xf32>
    %106 = vector.shape_cast %105 : vector<8xf32> to vector<8x1xf32>
    %107 = vector.broadcast %106 : vector<8x1xf32> to vector<8x16xf32>
    %108 = arith.subf %104, %107 : vector<8x16xf32>
    %109 = math.exp %108 : vector<8x16xf32>
    %cst_62 = arith.constant dense<0.000000e+00> : vector<8xf32>
    %110 = vector.multi_reduction <add>, %109, %cst_62 [1] : vector<8x16xf32> to vector<8xf32>
    %111 = vector.shape_cast %110 : vector<8xf32> to vector<8x1xf32>
    %112 = arith.truncf %109 : vector<8x16xf32> to vector<8x16xbf16>
    %cst_63 = arith.constant dense<0.000000e+00> : vector<8x8xf32>
    %113 = tpu.matmul %112, %99, %cst_63 {dimension_numbers = #tpu.dot_dimension_numbers<[1], [0], [0], [1], [0, 0, 1, 1], [], []>} : vector<8x16xbf16>, vector<16x8xbf16>, vector<8x8xf32> -> vector<8x8xf32>
    %114 = tpu.reciprocal %111 {approx = true} : vector<8x1xf32> -> vector<8x1xf32>
    %115 = vector.broadcast %114 : vector<8x1xf32> to vector<8x8xf32>
    %116 = arith.mulf %113, %115 : vector<8x8xf32>
    %c0_64 = arith.constant 0 : index
    %c3 = arith.constant 3 : index
    %c0_65 = arith.constant 0 : index
    %c0_66 = arith.constant 0 : index
    %117 = vector.load %arg4[%c0_64, %c3, %c0_65, %c0_66] : memref<1x4x8x8xf32, #tpu.memory_space<vmem>>, vector<1x1x8x8xf32>
    %118 = vector.shape_cast %117 : vector<1x1x8x8xf32> to vector<8x8xf32>
    %119 = vector.shape_cast %116 : vector<8x8xf32> to vector<1x1x8x8xf32>
    tpu.vector_store %arg4[%c0_64, %c3, %c0_65, %c0_66], %119 {strides = array<i32>} : memref<1x4x8x8xf32, #tpu.memory_space<vmem>>, vector<1x1x8x8xf32>,
    return
  }
  func.func @transform_0(%arg0: i32) -> (i32, i32, i32) {
    %c0_i32 = arith.constant 0 : i32
    %c0_i32_0 = arith.constant 0 : i32
    %c0_i32_1 = arith.constant 0 : i32
    return %arg0, %c0_i32, %c0_i32_0 : i32, i32, i32
  }
  func.func @transform_1(%arg0: i32) -> (i32, i32, i32) {
    %c0_i32 = arith.constant 0 : i32
    %c0_i32_0 = arith.constant 0 : i32
    %c0_i32_1 = arith.constant 0 : i32
    return %arg0, %c0_i32, %c0_i32_0 : i32, i32, i32
  }
  func.func @transform_2(%arg0: i32) -> (i32, i32, i32) {
    %c0_i32 = arith.constant 0 : i32
    %c0_i32_0 = arith.constant 0 : i32
    %c0_i32_1 = arith.constant 0 : i32
    return %arg0, %c0_i32, %c0_i32_0 : i32, i32, i32
  }
  func.func @transform_3(%arg0: i32) -> (i32, i32, i32, i32) {
    %c0_i32 = arith.constant 0 : i32
    %c0_i32_0 = arith.constant 0 : i32
    %c0_i32_1 = arith.constant 0 : i32
    %c0_i32_2 = arith.constant 0 : i32
    return %arg0, %c0_i32, %c0_i32_0, %c0_i32_1 : i32, i32, i32, i32
  }
}

module attributes {stable_mosaic.version = 11 : i64} {
  func.func @_linear_kernel(%arg0: i32, %arg1: i32, %arg2: i32, %arg3: memref<16x32xf32, #tpu.memory_space<vmem>>, %arg4: memref<32x32xf32, #tpu.memory_space<vmem>>, %arg5: memref<1x32xf32, #tpu.memory_space<vmem>>, %arg6: memref<16x32xf32, #tpu.memory_space<vmem>>, %arg7: memref<16x32xf32, #tpu.memory_space<vmem>>) attributes {dimension_semantics = [#tpu.dimension_semantics<parallel>, #tpu.dimension_semantics<parallel>, #tpu.dimension_semantics<arbitrary>], iteration_bounds = array<i64: 1, 1, 1>, scalar_prefetch = 0 : i64, scratch_operands = 1 : i64, tpu.core_type = #tpu.core_type<tc>, window_params = [{transform_indices = @transform_0, window_bounds = array<i64: 16, 32>}, {transform_indices = @transform_1, window_bounds = array<i64: 32, 32>}, {transform_indices = @transform_2, window_bounds = array<i64: 1, 32>}, {transform_indices = @transform_3, window_bounds = array<i64: 16, 32>}]} {
    %c0_i32 = arith.constant 0 : i32
    %0 = arith.cmpi eq, %arg2, %c0_i32 : i32
    %1 = arith.extui %0 : i1 to i32
    %c0_i32_0 = arith.constant 0 : i32
    %2 = arith.cmpi ne, %1, %c0_i32_0 : i32
    scf.if %2 {
      %cst_10 = arith.constant 0.000000e+00 : f32
      %14 = vector.broadcast %cst_10 : f32 to vector<16x32xf32>
      %c0_11 = arith.constant 0 : index
      %c0_12 = arith.constant 0 : index
      %15 = vector.load %arg7[%c0_11, %c0_12] : memref<16x32xf32, #tpu.memory_space<vmem>>, vector<16x32xf32>
      tpu.vector_store %arg7[%c0_11, %c0_12], %14 {strides = array<i32>} : memref<16x32xf32, #tpu.memory_space<vmem>>, vector<16x32xf32>,
    } else {
    }
    %c0 = arith.constant 0 : index
    %c0_1 = arith.constant 0 : index
    %3 = vector.load %arg3[%c0, %c0_1] : memref<16x32xf32, #tpu.memory_space<vmem>>, vector<16x32xf32>
    %4 = arith.truncf %3 : vector<16x32xf32> to vector<16x32xbf16>
    %c0_2 = arith.constant 0 : index
    %c0_3 = arith.constant 0 : index
    %5 = vector.load %arg4[%c0_2, %c0_3] : memref<32x32xf32, #tpu.memory_space<vmem>>, vector<32x32xf32>
    %6 = arith.truncf %5 : vector<32x32xf32> to vector<32x32xbf16>
    %c0_4 = arith.constant 0 : index
    %c0_5 = arith.constant 0 : index
    %7 = vector.load %arg7[%c0_4, %c0_5] : memref<16x32xf32, #tpu.memory_space<vmem>>, vector<16x32xf32>
    %cst = arith.constant dense<0.000000e+00> : vector<16x32xf32>
    %8 = tpu.matmul %4, %6, %cst {dimension_numbers = #tpu.dot_dimension_numbers<[1], [1], [0], [0], [0, 0, 1, 0], [], []>} : vector<16x32xbf16>, vector<32x32xbf16>, vector<16x32xf32> -> vector<16x32xf32>
    %9 = arith.addf %7, %8 : vector<16x32xf32>
    %c0_6 = arith.constant 0 : index
    %c0_7 = arith.constant 0 : index
    %10 = vector.load %arg7[%c0_6, %c0_7] : memref<16x32xf32, #tpu.memory_space<vmem>>, vector<16x32xf32>
    tpu.vector_store %arg7[%c0_6, %c0_7], %9 {strides = array<i32>} : memref<16x32xf32, #tpu.memory_space<vmem>>, vector<16x32xf32>,
    %c0_i32_8 = arith.constant 0 : i32
    %11 = arith.cmpi eq, %arg2, %c0_i32_8 : i32
    %12 = arith.extui %11 : i1 to i32
    %c0_i32_9 = arith.constant 0 : i32
    %13 = arith.cmpi ne, %12, %c0_i32_9 : i32
    scf.if %13 {
      %c0_10 = arith.constant 0 : index
      %c0_11 = arith.constant 0 : index
      %14 = vector.load %arg7[%c0_10, %c0_11] : memref<16x32xf32, #tpu.memory_space<vmem>>, vector<16x32xf32>
      %c0_12 = arith.constant 0 : index
      %c0_13 = arith.constant 0 : index
      %15 = vector.load %arg5[%c0_12, %c0_13] : memref<1x32xf32, #tpu.memory_space<vmem>>, vector<1x32xf32>
      %16 = vector.broadcast %15 : vector<1x32xf32> to vector<16x32xf32>
      %17 = arith.addf %14, %16 : vector<16x32xf32>
      %c0_14 = arith.constant 0 : index
      %c0_15 = arith.constant 0 : index
      %18 = vector.load %arg6[%c0_14, %c0_15] : memref<16x32xf32, #tpu.memory_space<vmem>>, vector<16x32xf32>
      tpu.vector_store %arg6[%c0_14, %c0_15], %17 {strides = array<i32>} : memref<16x32xf32, #tpu.memory_space<vmem>>, vector<16x32xf32>,
    } else {
    }
    return
  }
  func.func @transform_0(%arg0: i32, %arg1: i32, %arg2: i32) -> (i32, i32) {
    %c0_i32 = arith.constant 0 : i32
    return %arg0, %arg2 : i32, i32
  }
  func.func @transform_1(%arg0: i32, %arg1: i32, %arg2: i32) -> (i32, i32) {
    %c0_i32 = arith.constant 0 : i32
    return %arg1, %arg2 : i32, i32
  }
  func.func @transform_2(%arg0: i32, %arg1: i32, %arg2: i32) -> (i32, i32) {
    %c0_i32 = arith.constant 0 : i32
    %c0_i32_0 = arith.constant 0 : i32
    return %c0_i32, %arg1 : i32, i32
  }
  func.func @transform_3(%arg0: i32, %arg1: i32, %arg2: i32) -> (i32, i32) {
    %c0_i32 = arith.constant 0 : i32
    return %arg0, %arg1 : i32, i32
  }
}

</mosaic_0001>

<llo_original>
// kernel: attention_forward.4
$region0: #{attention_forward.4}
  #allocation0 [shape = 'u32[]', space=smem, size = 0x4, offset = 0x4, fixed_abs, tag = 'smem constant byte address 0x4 - core index']
  #allocation1 [shape = 'u32[144,128]{1,0:T(1,128)}', space=vmem, size = 0x12000, scoped, tag = 'internal scratch']
  #allocation2 [shape = 'f32[16,32]{1,0:T(8,128)}', space=vmem, size = 0x2000, scoped, tag = 'scratch operand']
  %s0 = inlined_call_operand.vmem [shape: f32[16,32], index: 0, kind: input, shape index: {}]
  %s1 = inlined_call_operand.vmem [shape: f32[32,32], index: 1, kind: input, shape index: {}]
  %s2 = inlined_call_operand.vmem [shape: f32[1,32], index: 2, kind: input, shape index: {}]
  %s3 = inlined_call_operand.vmem [shape: f32[16,32], index: 3, kind: output, shape index: {}]
  %s4 = sld [smem:[#allocation0]]
  $region30: #{attention_forward.4} parent=0
    _
  %s6 = ssub.s32 1, %s4
  %s7 = scalar_select 0, %s6, %s4
  // Predicated region
  $region2: #{attention_forward.4} parent=0 // pred_check
    _
  $region3: #{attention_forward.4} parent=0 // pred_check_branch
    %9 = sbr.rel (0) target = $region5
  $region4: #{attention_forward.4} parent=0 // pred_region
    _
  $region5: #{attention_forward.4} parent=0 // pred_fallthru
    _
  // Predicated region
  $region6: #{attention_forward.4} parent=0 // pred_check
    _
  $region7: #{attention_forward.4} parent=0 // pred_check_branch
    %11 = sbr.rel (0) target = $region9
  $region8: #{attention_forward.4} parent=0 // pred_region
    _
  $region9: #{attention_forward.4} parent=0 // pred_fallthru
    _
  // Predicated region
  $region10: #{attention_forward.4} parent=0 // pred_check
    _
  $region11: #{attention_forward.4} parent=0 // pred_check_branch
    %13 = sbr.rel (0) target = $region13
  $region12: #{attention_forward.4} parent=0 // pred_region
    _
  $region13: #{attention_forward.4} parent=0 // pred_fallthru
    _
  %p15 = scmp.eq.s32.totalorder 0, 0
  // Predicated region
  $region14: #{attention_forward.4} parent=0 // pred_check
    %p16 = pneg %p15
  $region15: #{attention_forward.4} parent=0 // pred_check_branch
    %18 = sbr.rel (%p16) target = $region17
  $region16: #{attention_forward.4} parent=0 // pred_region
    %vm19 = vcmask 261120
    %20 = vst.msk [vmem:[#allocation2] sm:$0xff] %vm19, 0.0
    %21 = vst.msk [vmem:[#allocation2 + $0x8] sm:$0xff] %vm19, 0.0
  $region17: #{attention_forward.4} parent=0 // pred_fallthru
    _
  %v22 = vld [vmem:[%s0] sm:$0xff]
  %v23 = vld [vmem:[%s0 + $0x8] sm:$0xff]
  %v24 = vpack.c.bf16 %v23, %v22
  %v25 = vld [vmem:[%s1] sm:$0xff]
  %v26 = vld [vmem:[%s1 + $0x8] sm:$0xff]
  %v27 = vld [vmem:[%s1 + $0x10] sm:$0xff]
  %v28 = vld [vmem:[%s1 + $0x18] sm:$0xff]
  %v29 = vpack.c.bf16 %v26, %v25
  %v30 = vpack.c.bf16 %v28, %v27
  %v31 = vld [vmem:[#allocation2] sm:$0xff]
  %v32 = vld [vmem:[#allocation2 + $0x8] sm:$0xff]
  %vm33 = vcmask 261120
  %v35 = vsel %vm33, %v24, 0
  %v38 = vsel %vm33, %v29, 0
  %v41 = vsel %vm33, %v30, 0
  %43 = vmatprep.subr.bf16.mxu0 0
  %44 = vmatpush1.bf16.xpose.msra.mxu0 0
  %45 = vmatprep.subr.bf16.mxu0 0
  %46 = vmatpush1.bf16.xpose.msra.mxu0 0
  %47 = vmatprep.subr.bf16.mxu0 0
  %48 = vmatpush1.bf16.xpose.msra.mxu0 0
  %49 = vmatprep.subr.bf16.mxu0 0
  %50 = vmatpush1.bf16.xpose.msra.mxu0 0
  %51 = vmatprep.subr.bf16.mxu0 0
  %52 = vmatpush1.bf16.xpose.msra.mxu0 0
  %53 = vmatprep.subr.bf16.mxu0 0
  %54 = vmatpush1.bf16.xpose.msra.mxu0 0
  %55 = vmatprep.subr.bf16.mxu0 0
  %56 = vmatpush1.bf16.xpose.msra.mxu0 %v41
  %57 = vmatprep.subr.bf16.mxu0 0
  %58 = vmatpush1.bf16.xpose.msra.mxu0 %v38
  %59 = vmatprep.subr.bf16.mxu0 0
  %60 = vmatpush2.bf16.xpose.msra.mxu0 0
  %61 = vmatprep.subr.bf16.mxu0 0
  %62 = vmatpush2.bf16.xpose.msra.mxu0 0
  %63 = vmatprep.subr.bf16.mxu0 0
  %64 = vmatpush2.bf16.xpose.msra.mxu0 0
  %65 = vmatprep.subr.bf16.mxu0 0
  %66 = vmatpush2.bf16.xpose.msra.mxu0 0
  %67 = vmatprep.subr.bf16.mxu0 0
  %68 = vmatpush2.bf16.xpose.msra.mxu0 0
  %69 = vmatprep.subr.bf16.mxu0 0
  %70 = vmatpush2.bf16.xpose.msra.mxu0 0
  %71 = vmatprep.subr.bf16.mxu0 0
  %72 = vmatpush2.bf16.xpose.msra.mxu0 0
  %73 = vmatprep.subr.bf16.mxu0 0
  %74 = vmatpush2.bf16.xpose.msra.mxu0 0
  %75 = vmatprep.mubr.bf16.mxu0 0
  %76 = vmatmul.mubr.bf16.gmra.mxu0 %v35
  %v77 = vpop.f32.mrf.mxu0
  %v78 = vadd.f32 0.0, %v77
  %v79 = vpop.f32.mrf.mxu0
  %v80 = vpop.f32.mrf.mxu0
  %v81 = vadd.f32 0.0, %v80
  %v82 = vpop.f32.mrf.mxu0
  %83 = vdwg.mxu0
  %v84 = vadd.f32 %v31, %v78
  %v85 = vadd.f32 %v32, %v81
  %86 = vst.msk [vmem:[#allocation2] sm:$0xff] %vm33, %v84
  %87 = vst.msk [vmem:[#allocation2 + $0x8] sm:$0xff] %vm33, %v85
  // Predicated region
  $region18: #{attention_forward.4} parent=0 // pred_check
    %p88 = pneg %p15
  $region19: #{attention_forward.4} parent=0 // pred_check_branch
    %90 = sbr.rel (%p88) target = $region21
  $region20: #{attention_forward.4} parent=0 // pred_region
    %v91 = vld [vmem:[#allocation2] sm:$0xff]
    %v92 = vld [vmem:[#allocation2 + $0x8] sm:$0xff]
    %v93 = vld [vmem:[%s2] sm:$0x1]
    %v95 = vlaneseq
    %v96 = vshrl.u32 %v95, 7
    %v97 = vsub.s32 0, %v96
    %v98 = vrot.slane %v93, %v97
    %v100 = vadd.f32 %v91, %v98
    %v101 = vadd.f32 %v92, %v98
    %102 = vst.msk [vmem:[%s3] sm:$0xff] %vm33, %v100
    %103 = vst.msk [vmem:[%s3 + $0x8] sm:$0xff] %vm33, %v101
  $region21: #{attention_forward.4} parent=0 // pred_fallthru
    _
  // Predicated region
  $region22: #{attention_forward.4} parent=0 // pred_check
    _
  $region23: #{attention_forward.4} parent=0 // pred_check_branch
    %105 = sbr.rel (0) target = $region25
  $region24: #{attention_forward.4} parent=0 // pred_region
    _
  $region25: #{attention_forward.4} parent=0 // pred_fallthru
    _
  // Predicated region
  $region26: #{attention_forward.4} parent=0 // pred_check
    _
  $region27: #{attention_forward.4} parent=0 // pred_check_branch
    %107 = sbr.rel (0) target = $region29
  $region28: #{attention_forward.4} parent=0 // pred_region
    _
  $region29: #{attention_forward.4} parent=0 // pred_fallthru
    _

// kernel: attention_forward.7
$region0: #{attention_forward.7}
  #allocation0 [shape = 'u32[]', space=smem, size = 0x4, offset = 0x4, fixed_abs, tag = 'smem constant byte address 0x4 - core index']
  #allocation1 [shape = 'u32[144,128]{1,0:T(1,128)}', space=vmem, size = 0x12000, scoped, tag = 'internal scratch']
  #allocation2 [shape = 'f32[16,32]{1,0:T(8,128)}', space=vmem, size = 0x2000, scoped, tag = 'scratch operand']
  %s0 = inlined_call_operand.vmem [shape: f32[16,32], index: 0, kind: input, shape index: {}]
  %s1 = inlined_call_operand.vmem [shape: f32[32,32], index: 1, kind: input, shape index: {}]
  %s2 = inlined_call_operand.vmem [shape: f32[1,32], index: 2, kind: input, shape index: {}]
  %s3 = inlined_call_operand.hbm [shape: f32[16,32], index: 3, kind: output, shape index: {}]
  %s4 = sld [smem:[#allocation0]]
  $region30: #{attention_forward.7} parent=0
    _
  %s6 = ssub.s32 1, %s4
  %s7 = scalar_select 0, %s6, %s4
  $region1: #{attention_forward.7} parent=0
    #allocation3 [shape = 'u8[8192]{0}', space=vmem, size = 0x2000, scoped, tag = 'output window, operand 0, single buffered']
    #allocation4 [shape = 's32[1]{0}', space=sflag, size = 0x4, scoped, tag = 'scoped memory for attention_forward.7']
    %8 = vsyncpa [#allocation4], 0
    // Predicated region
    $region2: #{attention_forward.7} parent=1 // pred_check
      _
    $region3: #{attention_forward.7} parent=1 // pred_check_branch
      %10 = sbr.rel (0) target = $region5
    $region4: #{attention_forward.7} parent=1 // pred_region
      _
    $region5: #{attention_forward.7} parent=1 // pred_fallthru
      _
    // Predicated region
    $region6: #{attention_forward.7} parent=1 // pred_check
      _
    $region7: #{attention_forward.7} parent=1 // pred_check_branch
      %12 = sbr.rel (0) target = $region9
    $region8: #{attention_forward.7} parent=1 // pred_region
      _
    $region9: #{attention_forward.7} parent=1 // pred_fallthru
      _
    // Predicated region
    $region10: #{attention_forward.7} parent=1 // pred_check
      _
    $region11: #{attention_forward.7} parent=1 // pred_check_branch
      %14 = sbr.rel (0) target = $region13
    $region12: #{attention_forward.7} parent=1 // pred_region
      _
    $region13: #{attention_forward.7} parent=1 // pred_fallthru
      _
    %p16 = scmp.eq.s32.totalorder 0, 0
    // Predicated region
    $region14: #{attention_forward.7} parent=1 // pred_check
      %p17 = pneg %p16
    $region15: #{attention_forward.7} parent=1 // pred_check_branch
      %19 = sbr.rel (%p17) target = $region17
    $region16: #{attention_forward.7} parent=1 // pred_region
      %vm20 = vcmask 261120
      %21 = vst.msk [vmem:[#allocation2] sm:$0xff] %vm20, 0.0
      %22 = vst.msk [vmem:[#allocation2 + $0x8] sm:$0xff] %vm20, 0.0
    $region17: #{attention_forward.7} parent=1 // pred_fallthru
      _
    %v23 = vld [vmem:[%s0] sm:$0xff]
    %v24 = vld [vmem:[%s0 + $0x8] sm:$0xff]
    %v25 = vpack.c.bf16 %v24, %v23
    %v26 = vld [vmem:[%s1] sm:$0xff]
    %v27 = vld [vmem:[%s1 + $0x8] sm:$0xff]
    %v28 = vld [vmem:[%s1 + $0x10] sm:$0xff]
    %v29 = vld [vmem:[%s1 + $0x18] sm:$0xff]
    %v30 = vpack.c.bf16 %v27, %v26
    %v31 = vpack.c.bf16 %v29, %v28
    %v32 = vld [vmem:[#allocation2] sm:$0xff]
    %v33 = vld [vmem:[#allocation2 + $0x8] sm:$0xff]
    %vm34 = vcmask 261120
    %v36 = vsel %vm34, %v25, 0
    %v39 = vsel %vm34, %v30, 0
    %v42 = vsel %vm34, %v31, 0
    %44 = vmatprep.subr.bf16.mxu0 0
    %45 = vmatpush1.bf16.xpose.msra.mxu0 0
    %46 = vmatprep.subr.bf16.mxu0 0
    %47 = vmatpush1.bf16.xpose.msra.mxu0 0
    %48 = vmatprep.subr.bf16.mxu0 0
    %49 = vmatpush1.bf16.xpose.msra.mxu0 0
    %50 = vmatprep.subr.bf16.mxu0 0
    %51 = vmatpush1.bf16.xpose.msra.mxu0 0
    %52 = vmatprep.subr.bf16.mxu0 0
    %53 = vmatpush1.bf16.xpose.msra.mxu0 0
    %54 = vmatprep.subr.bf16.mxu0 0
    %55 = vmatpush1.bf16.xpose.msra.mxu0 0
    %56 = vmatprep.subr.bf16.mxu0 0
    %57 = vmatpush1.bf16.xpose.msra.mxu0 %v42
    %58 = vmatprep.subr.bf16.mxu0 0
    %59 = vmatpush1.bf16.xpose.msra.mxu0 %v39
    %60 = vmatprep.subr.bf16.mxu0 0
    %61 = vmatpush2.bf16.xpose.msra.mxu0 0
    %62 = vmatprep.subr.bf16.mxu0 0
    %63 = vmatpush2.bf16.xpose.msra.mxu0 0
    %64 = vmatprep.subr.bf16.mxu0 0
    %65 = vmatpush2.bf16.xpose.msra.mxu0 0
    %66 = vmatprep.subr.bf16.mxu0 0
    %67 = vmatpush2.bf16.xpose.msra.mxu0 0
    %68 = vmatprep.subr.bf16.mxu0 0
    %69 = vmatpush2.bf16.xpose.msra.mxu0 0
    %70 = vmatprep.subr.bf16.mxu0 0
    %71 = vmatpush2.bf16.xpose.msra.mxu0 0
    %72 = vmatprep.subr.bf16.mxu0 0
    %73 = vmatpush2.bf16.xpose.msra.mxu0 0
    %74 = vmatprep.subr.bf16.mxu0 0
    %75 = vmatpush2.bf16.xpose.msra.mxu0 0
    %76 = vmatprep.mubr.bf16.mxu0 0
    %77 = vmatmul.mubr.bf16.gmra.mxu0 %v36
    %v78 = vpop.f32.mrf.mxu0
    %v79 = vadd.f32 0.0, %v78
    %v80 = vpop.f32.mrf.mxu0
    %v81 = vpop.f32.mrf.mxu0
    %v82 = vadd.f32 0.0, %v81
    %v83 = vpop.f32.mrf.mxu0
    %84 = vdwg.mxu0
    %v85 = vadd.f32 %v32, %v79
    %v86 = vadd.f32 %v33, %v82
    %87 = vst.msk [vmem:[#allocation2] sm:$0xff] %vm34, %v85
    %88 = vst.msk [vmem:[#allocation2 + $0x8] sm:$0xff] %vm34, %v86
    // Predicated region
    $region18: #{attention_forward.7} parent=1 // pred_check
      %p89 = pneg %p16
    $region19: #{attention_forward.7} parent=1 // pred_check_branch
      %91 = sbr.rel (%p89) target = $region21
    $region20: #{attention_forward.7} parent=1 // pred_region
      %v92 = vld [vmem:[#allocation2] sm:$0xff]
      %v93 = vld [vmem:[#allocation2 + $0x8] sm:$0xff]
      %v94 = vld [vmem:[%s2] sm:$0x1]
      %v96 = vlaneseq
      %v97 = vshrl.u32 %v96, 7
      %v98 = vsub.s32 0, %v97
      %v99 = vrot.slane %v94, %v98
      %v101 = vadd.f32 %v92, %v99
      %v102 = vadd.f32 %v93, %v99
      %103 = vst.msk [vmem:[#allocation3] sm:$0xff] %vm34, %v101
      %104 = vst.msk [vmem:[#allocation3 + $0x8] sm:$0xff] %vm34, %v102
    $region21: #{attention_forward.7} parent=1 // pred_fallthru
      _
    // Predicated region
    $region22: #{attention_forward.7} parent=1 // pred_check
      _
    $region23: #{attention_forward.7} parent=1 // pred_check_branch
      %106 = sbr.rel (0) target = $region25
    $region24: #{attention_forward.7} parent=1 // pred_region
      %s108 = ssub.s32 256, 256
      %109 = vsyncadd [#allocation4], %s108
      %s110 = sshll.u32 [#allocation3], 4
      %s111 = int_to_ptr.vmem [resolvable:$true] %s110
      %116 = dma.vmem_to_hbm [thread:$0]  %s111, 256, %s3, [#allocation4], 128, 128, 8
    $region25: #{attention_forward.7} parent=1 // pred_fallthru
      _
    // Predicated region
    $region26: #{attention_forward.7} parent=1 // pred_check
      _
    $region27: #{attention_forward.7} parent=1 // pred_check_branch
      %118 = sbr.rel (0) target = $region29
    $region28: #{attention_forward.7} parent=1 // pred_region
      %119 = dma.done [#allocation4], 256
    $region29: #{attention_forward.7} parent=1 // pred_fallthru
      _
    %120 = vsyncpa [#allocation4], 1

// kernel: attention_forward.5
$region0: #{attention_forward.5}
  #allocation0 [shape = 'u32[]', space=smem, size = 0x4, offset = 0x4, fixed_abs, tag = 'smem constant byte address 0x4 - core index']
  #allocation1 [shape = 'u32[144,128]{1,0:T(1,128)}', space=vmem, size = 0x12000, scoped, tag = 'internal scratch']
  #allocation2 [shape = 'f32[32,64]{1,0:T(8,128)}', space=vmem, size = 0x4000, scoped, tag = 'scratch operand']
  %s0 = inlined_call_operand.vmem [shape: f32[32,32], index: 0, kind: input, shape index: {}]
  %s1 = inlined_call_operand.vmem [shape: f32[64,32], index: 1, kind: input, shape index: {}]
  %s2 = inlined_call_operand.vmem [shape: f32[1,64], index: 2, kind: input, shape index: {}]
  %s3 = inlined_call_operand.vmem [shape: f32[32,64], index: 3, kind: output, shape index: {}]
  %s4 = sld [smem:[#allocation0]]
  $region30: #{attention_forward.5} parent=0
    _
  %s6 = ssub.s32 1, %s4
  %s7 = scalar_select 0, %s6, %s4
  // Predicated region
  $region2: #{attention_forward.5} parent=0 // pred_check
    _
  $region3: #{attention_forward.5} parent=0 // pred_check_branch
    %9 = sbr.rel (0) target = $region5
  $region4: #{attention_forward.5} parent=0 // pred_region
    _
  $region5: #{attention_forward.5} parent=0 // pred_fallthru
    _
  // Predicated region
  $region6: #{attention_forward.5} parent=0 // pred_check
    _
  $region7: #{attention_forward.5} parent=0 // pred_check_branch
    %11 = sbr.rel (0) target = $region9
  $region8: #{attention_forward.5} parent=0 // pred_region
    _
  $region9: #{attention_forward.5} parent=0 // pred_fallthru
    _
  // Predicated region
  $region10: #{attention_forward.5} parent=0 // pred_check
    _
  $region11: #{attention_forward.5} parent=0 // pred_check_branch
    %13 = sbr.rel (0) target = $region13
  $region12: #{attention_forward.5} parent=0 // pred_region
    _
  $region13: #{attention_forward.5} parent=0 // pred_fallthru
    _
  %p15 = scmp.eq.s32.totalorder 0, 0
  // Predicated region
  $region14: #{attention_forward.5} parent=0 // pred_check
    %p16 = pneg %p15
  $region15: #{attention_forward.5} parent=0 // pred_check_branch
    %18 = sbr.rel (%p16) target = $region17
  $region16: #{attention_forward.5} parent=0 // pred_region
    %vm19 = vcmask 523264
    %20 = vst.msk [vmem:[#allocation2] sm:$0xff] %vm19, 0.0
    %21 = vst.msk [vmem:[#allocation2 + $0x8] sm:$0xff] %vm19, 0.0
    %22 = vst.msk [vmem:[#allocation2 + $0x10] sm:$0xff] %vm19, 0.0
    %23 = vst.msk [vmem:[#allocation2 + $0x18] sm:$0xff] %vm19, 0.0
  $region17: #{attention_forward.5} parent=0 // pred_fallthru
    _
  %v24 = vld [vmem:[%s0] sm:$0xff]
  %v25 = vld [vmem:[%s0 + $0x8] sm:$0xff]
  %v26 = vld [vmem:[%s0 + $0x10] sm:$0xff]
  %v27 = vld [vmem:[%s0 + $0x18] sm:$0xff]
  %v28 = vpack.c.bf16 %v25, %v24
  %v29 = vpack.c.bf16 %v27, %v26
  %v30 = vld [vmem:[%s1] sm:$0xff]
  %v31 = vld [vmem:[%s1 + $0x8] sm:$0xff]
  %v32 = vld [vmem:[%s1 + $0x10] sm:$0xff]
  %v33 = vld [vmem:[%s1 + $0x18] sm:$0xff]
  %v34 = vld [vmem:[%s1 + $0x20] sm:$0xff]
  %v35 = vld [vmem:[%s1 + $0x28] sm:$0xff]
  %v36 = vld [vmem:[%s1 + $0x30] sm:$0xff]
  %v37 = vld [vmem:[%s1 + $0x38] sm:$0xff]
  %v38 = vpack.c.bf16 %v31, %v30
  %v39 = vpack.c.bf16 %v33, %v32
  %v40 = vpack.c.bf16 %v35, %v34
  %v41 = vpack.c.bf16 %v37, %v36
  %v42 = vld [vmem:[#allocation2] sm:$0xff]
  %v43 = vld [vmem:[#allocation2 + $0x8] sm:$0xff]
  %v44 = vld [vmem:[#allocation2 + $0x10] sm:$0xff]
  %v45 = vld [vmem:[#allocation2 + $0x18] sm:$0xff]
  %vm46 = vcmask 261120
  %v48 = vsel %vm46, %v28, 0
  %v51 = vsel %vm46, %v29, 0
  %v54 = vsel %vm46, %v38, 0
  %v57 = vsel %vm46, %v39, 0
  %v60 = vsel %vm46, %v40, 0
  %v63 = vsel %vm46, %v41, 0
  %65 = vmatprep.subr.bf16.mxu0 0
  %66 = vmatpush1.bf16.xpose.msra.mxu0 0
  %67 = vmatprep.subr.bf16.mxu0 0
  %68 = vmatpush1.bf16.xpose.msra.mxu0 0
  %69 = vmatprep.subr.bf16.mxu0 0
  %70 = vmatpush1.bf16.xpose.msra.mxu0 0
  %71 = vmatprep.subr.bf16.mxu0 0
  %72 = vmatpush1.bf16.xpose.msra.mxu0 0
  %73 = vmatprep.subr.bf16.mxu0 0
  %74 = vmatpush1.bf16.xpose.msra.mxu0 %v63
  %75 = vmatprep.subr.bf16.mxu0 0
  %76 = vmatpush1.bf16.xpose.msra.mxu0 %v60
  %77 = vmatprep.subr.bf16.mxu0 0
  %78 = vmatpush1.bf16.xpose.msra.mxu0 %v57
  %79 = vmatprep.subr.bf16.mxu0 0
  %80 = vmatpush1.bf16.xpose.msra.mxu0 %v54
  %81 = vmatprep.subr.bf16.mxu0 0
  %82 = vmatpush2.bf16.xpose.msra.mxu0 0
  %83 = vmatprep.subr.bf16.mxu0 0
  %84 = vmatpush2.bf16.xpose.msra.mxu0 0
  %85 = vmatprep.subr.bf16.mxu0 0
  %86 = vmatpush2.bf16.xpose.msra.mxu0 0
  %87 = vmatprep.subr.bf16.mxu0 0
  %88 = vmatpush2.bf16.xpose.msra.mxu0 0
  %89 = vmatprep.subr.bf16.mxu0 0
  %90 = vmatpush2.bf16.xpose.msra.mxu0 0
  %91 = vmatprep.subr.bf16.mxu0 0
  %92 = vmatpush2.bf16.xpose.msra.mxu0 0
  %93 = vmatprep.subr.bf16.mxu0 0
  %94 = vmatpush2.bf16.xpose.msra.mxu0 0
  %95 = vmatprep.subr.bf16.mxu0 0
  %96 = vmatpush2.bf16.xpose.msra.mxu0 0
  %97 = vmatprep.mubr.bf16.mxu0 0
  %98 = vmatmul.mubr.bf16.gmra.mxu0 %v48
  %v99 = vpop.f32.mrf.mxu0
  %v100 = vadd.f32 0.0, %v99
  %v101 = vpop.f32.mrf.mxu0
  %v102 = vpop.f32.mrf.mxu0
  %v103 = vadd.f32 0.0, %v102
  %v104 = vpop.f32.mrf.mxu0
  %105 = vmatprep.mubr.bf16.mxu0 0
  %106 = vmatmul.mubr.bf16.gmra.mxu0 %v51
  %v107 = vpop.f32.mrf.mxu0
  %v108 = vadd.f32 0.0, %v107
  %v109 = vpop.f32.mrf.mxu0
  %v110 = vpop.f32.mrf.mxu0
  %v111 = vadd.f32 0.0, %v110
  %v112 = vpop.f32.mrf.mxu0
  %113 = vdwg.mxu0
  %v114 = vadd.f32 %v42, %v100
  %v115 = vadd.f32 %v43, %v103
  %v116 = vadd.f32 %v44, %v108
  %v117 = vadd.f32 %v45, %v111
  %vm118 = vcmask 523264
  %119 = vst.msk [vmem:[#allocation2] sm:$0xff] %vm118, %v114
  %120 = vst.msk [vmem:[#allocation2 + $0x8] sm:$0xff] %vm118, %v115
  %121 = vst.msk [vmem:[#allocation2 + $0x10] sm:$0xff] %vm118, %v116
  %122 = vst.msk [vmem:[#allocation2 + $0x18] sm:$0xff] %vm118, %v117
  // Predicated region
  $region18: #{attention_forward.5} parent=0 // pred_check
    %p123 = pneg %p15
  $region19: #{attention_forward.5} parent=0 // pred_check_branch
    %125 = sbr.rel (%p123) target = $region21
  $region20: #{attention_forward.5} parent=0 // pred_region
    %v126 = vld [vmem:[#allocation2] sm:$0xff]
    %v127 = vld [vmem:[#allocation2 + $0x8] sm:$0xff]
    %v128 = vld [vmem:[#allocation2 + $0x10] sm:$0xff]
    %v129 = vld [vmem:[#allocation2 + $0x18] sm:$0xff]
    %v130 = vld [vmem:[%s2] sm:$0x1]
    %v132 = vlaneseq
    %v133 = vshrl.u32 %v132, 7
    %v134 = vsub.s32 0, %v133
    %v135 = vrot.slane %v130, %v134
    %v137 = vadd.f32 %v126, %v135
    %v138 = vadd.f32 %v127, %v135
    %v139 = vadd.f32 %v128, %v135
    %v140 = vadd.f32 %v129, %v135
    %141 = vst.msk [vmem:[%s3] sm:$0xff] %vm118, %v137
    %142 = vst.msk [vmem:[%s3 + $0x8] sm:$0xff] %vm118, %v138
    %143 = vst.msk [vmem:[%s3 + $0x10] sm:$0xff] %vm118, %v139
    %144 = vst.msk [vmem:[%s3 + $0x18] sm:$0xff] %vm118, %v140
  $region21: #{attention_forward.5} parent=0 // pred_fallthru
    _
  // Predicated region
  $region22: #{attention_forward.5} parent=0 // pred_check
    _
  $region23: #{attention_forward.5} parent=0 // pred_check_branch
    %146 = sbr.rel (0) target = $region25
  $region24: #{attention_forward.5} parent=0 // pred_region
    _
  $region25: #{attention_forward.5} parent=0 // pred_fallthru
    _
  // Predicated region
  $region26: #{attention_forward.5} parent=0 // pred_check
    _
  $region27: #{attention_forward.5} parent=0 // pred_check_branch
    %148 = sbr.rel (0) target = $region29
  $region28: #{attention_forward.5} parent=0 // pred_region
    _
  $region29: #{attention_forward.5} parent=0 // pred_fallthru
    _

// kernel: attention_forward.6
$region0: #{attention_forward.6}
  #allocation0 [shape = 'u32[]', space=smem, size = 0x4, offset = 0x4, fixed_abs, tag = 'smem constant byte address 0x4 - core index']
  #allocation1 [shape = 'u32[144,128]{1,0:T(1,128)}', space=vmem, size = 0x12000, scoped, tag = 'internal scratch']
  %s0 = inlined_call_operand.vmem [shape: f32[2,8,32], index: 0, kind: input, shape index: {}]
  %s1 = inlined_call_operand.vmem [shape: f32[2,16,64], index: 1, kind: input, shape index: {}]
  %s2 = inlined_call_operand.vmem [shape: s8[2,8,16], index: 2, kind: input, shape index: {}]
  %s3 = inlined_call_operand.vmem [shape: f32[2,4,8,8], index: 3, kind: output, shape index: {}]
  %s4 = sld [smem:[#allocation0]]
  $region45: #{attention_forward.6} parent=0
    _
  %s6 = ssub.s32 1, %s4
  %s7 = scalar_select 0, %s6, %s4
  loop: start=0, step=1, limit=4
  $region2: #{attention_forward.6} parent=0 // loop_pre_header
    _
  $region3: #{attention_forward.6} parent=0 // loop_header
    %s9 = sphi 0, %s13
    %p10 = scmp.ge.s32.totalorder %s9, 4
    %s19 = sphi 0, %s21
    %s22 = sphi 0, %s19
    %s23 = sphi 0, %s22
    %s39 = sphi 0, %s23
    %s45 = sphi 0, %s47
    %s48 = sphi 0, %s45
    %s49 = sphi 0, %s48
    %s65 = sphi 0, %s49
    %s71 = sphi 0, %s73
    %s74 = sphi 0, %s71
    %s75 = sphi 0, %s74
    %s91 = sphi 0, %s75
    %s97 = sphi 0, %s99
    %s100 = sphi 0, %s97
    %s101 = sphi 0, %s100
    %s117 = sphi 0, %s101
  $region4: #{attention_forward.6} parent=0 // loop_header_branch
    %12 = sbr.rel (%p10) target = $region8
  $region5: #{attention_forward.6} parent=0 // loop_body
    %s14 = ssub.s32 %s9, 1
    %s15 = ssub.s32 %s9, 2
    %s16 = sadd.s32 %s9, 1
    %s17 = ssub.s32 %s9, %s16
    %p18 = scmp.eq.s32.totalorder %s17, 0
    %s20 = sadd.s32 %s19, 1
    %s21 = scalar_select %p18, %s19, %s20
    %p24 = pneg %p18
    %p25 = scmp.eq.s32.totalorder %s9, 1
    %p26 = por %p24, %p25
    %p27 = scmp.ne.s32.totalorder %s19, %s22
    %p28 = scmp.eq.s32.totalorder %s9, 0
    %p29 = por %p27, %p28
    %p30 = scmp.ne.s32.totalorder %s19, %s22
    %p31 = scmp.eq.s32.totalorder %s14, 1
    %p32 = por %p30, %p31
    %p33 = scmp.ne.s32.totalorder %s22, %s23
    %p34 = scmp.eq.s32.totalorder %s14, 0
    %p35 = por %p33, %p34
    %p36 = scmp.ne.s32.totalorder %s22, %s23
    %p37 = scmp.eq.s32.totalorder %s15, 1
    %p38 = por %p36, %p37
    %p40 = scmp.ne.s32.totalorder %s23, %s39
    %p41 = scmp.eq.s32.totalorder %s15, 0
    %p42 = por %p40, %p41
    %s43 = ssub.s32 %s9, %s16
    %p44 = scmp.eq.s32.totalorder %s43, 0
    %s46 = sadd.s32 %s45, 1
    %s47 = scalar_select %p44, %s45, %s46
    %p50 = pneg %p44
    %p51 = scmp.eq.s32.totalorder %s9, 1
    %p52 = por %p50, %p51
    %p53 = scmp.ne.s32.totalorder %s45, %s48
    %p54 = scmp.eq.s32.totalorder %s9, 0
    %p55 = por %p53, %p54
    %p56 = scmp.ne.s32.totalorder %s45, %s48
    %p57 = scmp.eq.s32.totalorder %s14, 1
    %p58 = por %p56, %p57
    %p59 = scmp.ne.s32.totalorder %s48, %s49
    %p60 = scmp.eq.s32.totalorder %s14, 0
    %p61 = por %p59, %p60
    %p62 = scmp.ne.s32.totalorder %s48, %s49
    %p63 = scmp.eq.s32.totalorder %s15, 1
    %p64 = por %p62, %p63
    %p66 = scmp.ne.s32.totalorder %s49, %s65
    %p67 = scmp.eq.s32.totalorder %s15, 0
    %p68 = por %p66, %p67
    %s69 = ssub.s32 %s9, %s16
    %p70 = scmp.eq.s32.totalorder %s69, 0
    %s72 = sadd.s32 %s71, 1
    %s73 = scalar_select %p70, %s71, %s72
    %p76 = pneg %p70
    %p77 = scmp.eq.s32.totalorder %s9, 1
    %p78 = por %p76, %p77
    %p79 = scmp.ne.s32.totalorder %s71, %s74
    %p80 = scmp.eq.s32.totalorder %s9, 0
    %p81 = por %p79, %p80
    %p82 = scmp.ne.s32.totalorder %s71, %s74
    %p83 = scmp.eq.s32.totalorder %s14, 1
    %p84 = por %p82, %p83
    %p85 = scmp.ne.s32.totalorder %s74, %s75
    %p86 = scmp.eq.s32.totalorder %s14, 0
    %p87 = por %p85, %p86
    %p88 = scmp.ne.s32.totalorder %s74, %s75
    %p89 = scmp.eq.s32.totalorder %s15, 1
    %p90 = por %p88, %p89
    %p92 = scmp.ne.s32.totalorder %s75, %s91
    %p93 = scmp.eq.s32.totalorder %s15, 0
    %p94 = por %p92, %p93
    %s95 = ssub.s32 %s9, %s16
    %p96 = scmp.eq.s32.totalorder %s95, 0
    %s98 = sadd.s32 %s97, 1
    %s99 = scalar_select %p96, %s97, %s98
    %p102 = pneg %p96
    %p103 = scmp.eq.s32.totalorder %s9, 1
    %p104 = por %p102, %p103
    %p105 = scmp.ne.s32.totalorder %s97, %s100
    %p106 = scmp.eq.s32.totalorder %s9, 0
    %p107 = por %p105, %p106
    %p108 = scmp.ne.s32.totalorder %s97, %s100
    %p109 = scmp.eq.s32.totalorder %s14, 1
    %p110 = por %p108, %p109
    %p111 = scmp.ne.s32.totalorder %s100, %s101
    %p112 = scmp.eq.s32.totalorder %s14, 0
    %p113 = por %p111, %p112
    %p114 = scmp.ne.s32.totalorder %s100, %s101
    %p115 = scmp.eq.s32.totalorder %s15, 1
    %p116 = por %p114, %p115
    %p118 = scmp.ne.s32.totalorder %s101, %s117
    %p119 = scmp.eq.s32.totalorder %s15, 0
    %p120 = por %p118, %p119
    %p121 = scmp.le.s32.totalorder 1, %s9
    %p122 = scmp.lt.s32.totalorder %s9, 3
    %p123 = pnand %p121, %p122
    %p124 = pneg %p123
    // Predicated region
    $region9: #{attention_forward.6} parent=5 // pred_check
      _
    $region10: #{attention_forward.6} parent=5 // pred_check_branch
      %126 = sbr.rel (%p123) target = $region12
    $region11: #{attention_forward.6} parent=5 // pred_region
      %s127 = ssub.s32 %s9, 1
    $region12: #{attention_forward.6} parent=5 // pred_fallthru
      _
    %p128 = scmp.lt.s32.totalorder %s9, 2
    // Predicated region
    $region13: #{attention_forward.6} parent=5 // pred_check
      %p129 = pneg %p128
    $region14: #{attention_forward.6} parent=5 // pred_check_branch
      %131 = sbr.rel (%p129) target = $region16
    $region15: #{attention_forward.6} parent=5 // pred_region
      // Predicated region
      $region17: #{attention_forward.6} parent=15 // pred_check
        %p132 = pneg %p29
      $region18: #{attention_forward.6} parent=15 // pred_check_branch
        %134 = sbr.rel (%p132) target = $region20
      $region19: #{attention_forward.6} parent=15 // pred_region
        %p135 = scmp.lt.s32.totalorder %s9, 1
        %s136 = scalar_select %p135, %s9, 1
        %s137 = smul.addr %s136, 8
        %s138 = scalar_lea.vmem %s0, %s137
      $region20: #{attention_forward.6} parent=15 // pred_fallthru
        _
      // Predicated region
      $region21: #{attention_forward.6} parent=15 // pred_check
        %p139 = pneg %p55
      $region22: #{attention_forward.6} parent=15 // pred_check_branch
        %141 = sbr.rel (%p139) target = $region24
      $region23: #{attention_forward.6} parent=15 // pred_region
        %p142 = scmp.lt.s32.totalorder %s9, 1
        %s143 = scalar_select %p142, %s9, 1
        %s144 = smul.addr %s143, 2
        %s145 = smul.addr %s144, 8
        %s146 = scalar_lea.vmem %s1, %s145
      $region24: #{attention_forward.6} parent=15 // pred_fallthru
        _
      // Predicated region
      $region25: #{attention_forward.6} parent=15 // pred_check
        %p147 = pneg %p81
      $region26: #{attention_forward.6} parent=15 // pred_check_branch
        %149 = sbr.rel (%p147) target = $region28
      $region27: #{attention_forward.6} parent=15 // pred_region
        %p150 = scmp.lt.s32.totalorder %s9, 1
        %s151 = scalar_select %p150, %s9, 1
        %s152 = smul.addr %s151, 2
        %s153 = scalar_lea.vmem %s2, %s152
      $region28: #{attention_forward.6} parent=15 // pred_fallthru
        _
    $region16: #{attention_forward.6} parent=5 // pred_fallthru
      _
    %p154 = scmp.le.s32.totalorder 1, %s9
    %p155 = scmp.lt.s32.totalorder %s9, 3
    %p156 = pnand %p154, %p155
    %p157 = pneg %p156
    // Predicated region
    $region29: #{attention_forward.6} parent=5 // pred_check
      _
    $region30: #{attention_forward.6} parent=5 // pred_check_branch
      %159 = sbr.rel (%p156) target = $region32
    $region31: #{attention_forward.6} parent=5 // pred_region
      %s160 = ssub.s32 %s9, 1
      %p161 = scmp.lt.s32.totalorder %s14, 1
      %s162 = scalar_select %p161, %s14, 1
      %s163 = smul.addr %s162, 8
      %s164 = scalar_lea.vmem %s0, %s163
      %p165 = pneg %p35
      %p166 = pneg %p32
      %p167 = scmp.lt.s32.totalorder %s14, 1
      %s168 = scalar_select %p167, %s14, 1
      %s169 = smul.addr %s168, 2
      %s170 = smul.addr %s169, 8
      %s171 = scalar_lea.vmem %s1, %s170
      %p172 = pneg %p61
      %p173 = pneg %p58
      %p174 = scmp.lt.s32.totalorder %s14, 1
      %s175 = scalar_select %p174, %s14, 1
      %s176 = smul.addr %s175, 2
      %s177 = scalar_lea.vmem %s2, %s176
      %p178 = pneg %p87
      %p179 = pneg %p84
      %p180 = pneg %p113
      %p181 = pneg %p110
      %p182 = scmp.lt.s32.totalorder %s14, 1
      %s183 = scalar_select %p182, %s14, 1
      %s184 = smul.addr %s183, 4
      %s185 = smul.addr %s184, 8
      %s186 = scalar_lea.vmem %s3, %s185
      %p187 = scmp.lt.s32.totalorder %s14, 1
      %s188 = scalar_select %p187, %s14, 1
      %s189 = smul.addr %s188, 8
      %s190 = scalar_lea.vmem %s0, %s189
      %p191 = scmp.lt.s32.totalorder %s14, 1
      %s192 = scalar_select %p191, %s14, 1
      %s193 = smul.addr %s192, 2
      %s194 = smul.addr %s193, 8
      %s195 = scalar_lea.vmem %s1, %s194
      %p196 = scmp.lt.s32.totalorder %s14, 1
      %s197 = scalar_select %p196, %s14, 1
      %s198 = smul.addr %s197, 2
      %s199 = scalar_lea.vmem %s2, %s198
      %p200 = scmp.lt.s32.totalorder %s14, 1
      %s201 = scalar_select %p200, %s14, 1
      %s202 = smul.addr %s201, 4
      %s203 = smul.addr %s202, 8
      %s204 = scalar_lea.vmem %s3, %s203
      %v208 = vld [vmem:[%s199] sm:$0x3]
      %vm209 = vnez %v208
      %v210 = vld [vmem:[%s190] sm:$0xff]
      %v211 = vpack.c.bf16 %v210, %v210
      %v212 = vld [vmem:[%s195] sm:$0xff]
      %v213 = vld [vmem:[%s195 + $0x8] sm:$0xff]
      %v214 = vpack.c.bf16 %v213, %v212
      %vm215 = vcmask 64512
      %v217 = vsel %vm215, %v211, 0
      %v220 = vsel %vm215, %v214, 0
      %222 = vmatprep.subr.bf16.mxu0 0
      %223 = vmatpush1.bf16.xpose.msra.mxu0 0
      %224 = vmatprep.subr.bf16.mxu0 0
      %225 = vmatpush1.bf16.xpose.msra.mxu0 0
      %226 = vmatprep.subr.bf16.mxu0 0
      %227 = vmatpush1.bf16.xpose.msra.mxu0 0
      %228 = vmatprep.subr.bf16.mxu0 0
      %229 = vmatpush1.bf16.xpose.msra.mxu0 0
      %230 = vmatprep.subr.bf16.mxu0 0
      %231 = vmatpush1.bf16.xpose.msra.mxu0 0
      %232 = vmatprep.subr.bf16.mxu0 0
      %233 = vmatpush1.bf16.xpose.msra.mxu0 0
      %234 = vmatprep.subr.bf16.mxu0 0
      %235 = vmatpush1.bf16.xpose.msra.mxu0 0
      %236 = vmatprep.subr.bf16.mxu0 0
      %237 = vmatpush1.bf16.xpose.msra.mxu0 %v220
      %238 = vmatprep.subr.bf16.mxu0 0
      %239 = vmatpush2.bf16.xpose.msra.mxu0 0
      %240 = vmatprep.subr.bf16.mxu0 0
      %241 = vmatpush2.bf16.xpose.msra.mxu0 0
      %242 = vmatprep.subr.bf16.mxu0 0
      %243 = vmatpush2.bf16.xpose.msra.mxu0 0
      %244 = vmatprep.subr.bf16.mxu0 0
      %245 = vmatpush2.bf16.xpose.msra.mxu0 0
      %246 = vmatprep.subr.bf16.mxu0 0
      %247 = vmatpush2.bf16.xpose.msra.mxu0 0
      %248 = vmatprep.subr.bf16.mxu0 0
      %249 = vmatpush2.bf16.xpose.msra.mxu0 0
      %250 = vmatprep.subr.bf16.mxu0 0
      %251 = vmatpush2.bf16.xpose.msra.mxu0 0
      %252 = vmatprep.subr.bf16.mxu0 0
      %253 = vmatpush2.bf16.xpose.msra.mxu0 0
      %254 = vmatprep.mubr.bf16.mxu0 0
      %255 = vmatmul.mubr.bf16.gmra.mxu0 %v217
      %v256 = vpop.f32.mrf.mxu0
      %v257 = vadd.f32 0.0, %v256
      %v258 = vpop.f32.mrf.mxu0
      %v259 = vpop.f32.mrf.mxu0
      %v260 = vpop.f32.mrf.mxu0
      %261 = vdwg.mxu0
      %v262 = vmul.f32 %v257, 0.35355338
      %v263 = vsel %vm209, 16843009, 0
      %v264 = vunpack.c.0.s8 %v263
      %vm265 = vcmp.ne.s32.totalorder %v264, 0
      %v266 = vsel %vm265, %v262, -1e+30
      %vm267 = vcmask 130048
      %v268 = vsel %vm267, %v266, -inf
      %269 = vmax.xlane.f32.xlu0 %v268
      %v270 = vpop.xlane.xlu0 %269
      %v271 = vsub.f32 %v266, %v270
      %v272 = vmul.f32 %v271, 1.442695
      %v273 = vpow.pop %v272
      %v274 = vsel %vm267, %v273, 0.0
      %275 = vadd.xlane.f32.xlu0 %v274
      %v276 = vpop.xlane.xlu0 %275
      %v277 = vpack.c.bf16 %v273, %v273
      %279 = vrot.lane.b32.xlu0 %v214, 96
      %v280 = vpop.permute.xlu0 %279
      %v283 = vsel %vm267, %v277, 0
      %285 = vmatprep.subr.bf16.mxu0 0
      %286 = vmatpush1.bf16.msra.mxu0 0
      %287 = vmatprep.subr.bf16.mxu0 0
      %288 = vmatpush1.bf16.msra.mxu0 0
      %289 = vmatprep.subr.bf16.mxu0 0
      %290 = vmatpush1.bf16.msra.mxu0 0
      %291 = vmatprep.subr.bf16.mxu0 0
      %292 = vmatpush1.bf16.msra.mxu0 0
      %293 = vmatprep.subr.bf16.mxu0 0
      %294 = vmatpush1.bf16.msra.mxu0 0
      %295 = vmatprep.subr.bf16.mxu0 0
      %296 = vmatpush1.bf16.msra.mxu0 0
      %297 = vmatprep.subr.bf16.mxu0 0
      %298 = vmatpush1.bf16.msra.mxu0 0
      %299 = vmatprep.subr.bf16.mxu0 0
      %300 = vmatpush1.bf16.msra.mxu0 %v280
      %301 = vmatprep.subr.bf16.mxu0 0
      %302 = vmatpush2.bf16.msra.mxu0 0
      %303 = vmatprep.subr.bf16.mxu0 0
      %304 = vmatpush2.bf16.msra.mxu0 0
      %305 = vmatprep.subr.bf16.mxu0 0
      %306 = vmatpush2.bf16.msra.mxu0 0
      %307 = vmatprep.subr.bf16.mxu0 0
      %308 = vmatpush2.bf16.msra.mxu0 0
      %309 = vmatprep.subr.bf16.mxu0 0
      %310 = vmatpush2.bf16.msra.mxu0 0
      %311 = vmatprep.subr.bf16.mxu0 0
      %312 = vmatpush2.bf16.msra.mxu0 0
      %313 = vmatprep.subr.bf16.mxu0 0
      %314 = vmatpush2.bf16.msra.mxu0 0
      %315 = vmatprep.subr.bf16.mxu0 0
      %316 = vmatpush2.bf16.msra.mxu0 0
      %317 = vmatprep.mubr.bf16.mxu0 0
      %318 = vmatmul.mubr.bf16.gmra.mxu0 %v283
      %v319 = vpop.f32.mrf.mxu0
      %v320 = vadd.f32 0.0, %v319
      %v321 = vpop.f32.mrf.mxu0
      %v322 = vpop.f32.mrf.mxu0
      %v323 = vpop.f32.mrf.mxu0
      %324 = vdwg.mxu0
      %v325 = vrcp.pop %v276
      %v326 = vmul.f32 %v320, %v325
      %327 = vst.msk [vmem:[%s204] sm:$0xff] %vm215, %v326
      %v328 = vld [vmem:[%s190] sm:$0xff]
      %v329 = vpack.c.bf16 %v328, %v328
      %v330 = vld [vmem:[%s195] sm:$0xff]
      %v331 = vld [vmem:[%s195 + $0x8] sm:$0xff]
      %v332 = vpack.c.bf16 %v331, %v330
      %334 = vrot.lane.b32.xlu0 %v329, 120
      %v335 = vpop.permute.xlu0 %334
      %337 = vrot.lane.b32.xlu0 %v332, 120
      %v338 = vpop.permute.xlu0 %337
      %v340 = vsel %vm215, %v335, 0
      %v343 = vsel %vm215, %v338, 0
      %345 = vmatprep.subr.bf16.mxu0 0
      %346 = vmatpush1.bf16.xpose.msra.mxu0 0
      %347 = vmatprep.subr.bf16.mxu0 0
      %348 = vmatpush1.bf16.xpose.msra.mxu0 0
      %349 = vmatprep.subr.bf16.mxu0 0
      %350 = vmatpush1.bf16.xpose.msra.mxu0 0
      %351 = vmatprep.subr.bf16.mxu0 0
      %352 = vmatpush1.bf16.xpose.msra.mxu0 0
      %353 = vmatprep.subr.bf16.mxu0 0
      %354 = vmatpush1.bf16.xpose.msra.mxu0 0
      %355 = vmatprep.subr.bf16.mxu0 0
      %356 = vmatpush1.bf16.xpose.msra.mxu0 0
      %357 = vmatprep.subr.bf16.mxu0 0
      %358 = vmatpush1.bf16.xpose.msra.mxu0 0
      %359 = vmatprep.subr.bf16.mxu0 0
      %360 = vmatpush1.bf16.xpose.msra.mxu0 %v343
      %361 = vmatprep.subr.bf16.mxu0 0
      %362 = vmatpush2.bf16.xpose.msra.mxu0 0
      %363 = vmatprep.subr.bf16.mxu0 0
      %364 = vmatpush2.bf16.xpose.msra.mxu0 0
      %365 = vmatprep.subr.bf16.mxu0 0
      %366 = vmatpush2.bf16.xpose.msra.mxu0 0
      %367 = vmatprep.subr.bf16.mxu0 0
      %368 = vmatpush2.bf16.xpose.msra.mxu0 0
      %369 = vmatprep.subr.bf16.mxu0 0
      %370 = vmatpush2.bf16.xpose.msra.mxu0 0
      %371 = vmatprep.subr.bf16.mxu0 0
      %372 = vmatpush2.bf16.xpose.msra.mxu0 0
      %373 = vmatprep.subr.bf16.mxu0 0
      %374 = vmatpush2.bf16.xpose.msra.mxu0 0
      %375 = vmatprep.subr.bf16.mxu0 0
      %376 = vmatpush2.bf16.xpose.msra.mxu0 0
      %377 = vmatprep.mubr.bf16.mxu0 0
      %378 = vmatmul.mubr.bf16.gmra.mxu0 %v340
      %v379 = vpop.f32.mrf.mxu0
      %v380 = vadd.f32 0.0, %v379
      %v381 = vpop.f32.mrf.mxu0
      %v382 = vpop.f32.mrf.mxu0
      %v383 = vpop.f32.mrf.mxu0
      %384 = vdwg.mxu0
      %v385 = vmul.f32 %v380, 0.35355338
      %v386 = vsel %vm265, %v385, -1e+30
      %v387 = vsel %vm267, %v386, -inf
      %388 = vmax.xlane.f32.xlu0 %v387
      %v389 = vpop.xlane.xlu0 %388
      %v390 = vsub.f32 %v386, %v389
      %v391 = vmul.f32 %v390, 1.442695
      %v392 = vpow.pop %v391
      %v393 = vsel %vm267, %v392, 0.0
      %394 = vadd.xlane.f32.xlu0 %v393
      %v395 = vpop.xlane.xlu0 %394
      %v396 = vpack.c.bf16 %v392, %v392
      %397 = vrot.lane.b32.xlu0 %v332, 88
      %v398 = vpop.permute.xlu0 %397
      %v401 = vsel %vm267, %v396, 0
      %403 = vmatprep.subr.bf16.mxu0 0
      %404 = vmatpush1.bf16.msra.mxu0 0
      %405 = vmatprep.subr.bf16.mxu0 0
      %406 = vmatpush1.bf16.msra.mxu0 0
      %407 = vmatprep.subr.bf16.mxu0 0
      %408 = vmatpush1.bf16.msra.mxu0 0
      %409 = vmatprep.subr.bf16.mxu0 0
      %410 = vmatpush1.bf16.msra.mxu0 0
      %411 = vmatprep.subr.bf16.mxu0 0
      %412 = vmatpush1.bf16.msra.mxu0 0
      %413 = vmatprep.subr.bf16.mxu0 0
      %414 = vmatpush1.bf16.msra.mxu0 0
      %415 = vmatprep.subr.bf16.mxu0 0
      %416 = vmatpush1.bf16.msra.mxu0 0
      %417 = vmatprep.subr.bf16.mxu0 0
      %418 = vmatpush1.bf16.msra.mxu0 %v398
      %419 = vmatprep.subr.bf16.mxu0 0
      %420 = vmatpush2.bf16.msra.mxu0 0
      %421 = vmatprep.subr.bf16.mxu0 0
      %422 = vmatpush2.bf16.msra.mxu0 0
      %423 = vmatprep.subr.bf16.mxu0 0
      %424 = vmatpush2.bf16.msra.mxu0 0
      %425 = vmatprep.subr.bf16.mxu0 0
      %426 = vmatpush2.bf16.msra.mxu0 0
      %427 = vmatprep.subr.bf16.mxu0 0
      %428 = vmatpush2.bf16.msra.mxu0 0
      %429 = vmatprep.subr.bf16.mxu0 0
      %430 = vmatpush2.bf16.msra.mxu0 0
      %431 = vmatprep.subr.bf16.mxu0 0
      %432 = vmatpush2.bf16.msra.mxu0 0
      %433 = vmatprep.subr.bf16.mxu0 0
      %434 = vmatpush2.bf16.msra.mxu0 0
      %435 = vmatprep.mubr.bf16.mxu0 0
      %436 = vmatmul.mubr.bf16.gmra.mxu0 %v401
      %v437 = vpop.f32.mrf.mxu0
      %v438 = vadd.f32 0.0, %v437
      %v439 = vpop.f32.mrf.mxu0
      %v440 = vpop.f32.mrf.mxu0
      %v441 = vpop.f32.mrf.mxu0
      %442 = vdwg.mxu0
      %v443 = vrcp.pop %v395
      %v444 = vmul.f32 %v438, %v443
      %s445 = scalar_lea.vmem %s204, 8
      %446 = vst.msk [vmem:[%s445] sm:$0xff] %vm215, %v444
      %v447 = vld [vmem:[%s190] sm:$0xff]
      %v448 = vpack.c.bf16 %v447, %v447
      %v449 = vld [vmem:[%s195] sm:$0xff]
      %v450 = vld [vmem:[%s195 + $0x8] sm:$0xff]
      %v451 = vpack.c.bf16 %v450, %v449
      %453 = vrot.lane.b32.xlu0 %v448, 112
      %v454 = vpop.permute.xlu0 %453
      %456 = vrot.lane.b32.xlu0 %v451, 112
      %v457 = vpop.permute.xlu0 %456
      %v459 = vsel %vm215, %v454, 0
      %v462 = vsel %vm215, %v457, 0
      %464 = vmatprep.subr.bf16.mxu0 0
      %465 = vmatpush1.bf16.xpose.msra.mxu0 0
      %466 = vmatprep.subr.bf16.mxu0 0
      %467 = vmatpush1.bf16.xpose.msra.mxu0 0
      %468 = vmatprep.subr.bf16.mxu0 0
      %469 = vmatpush1.bf16.xpose.msra.mxu0 0
      %470 = vmatprep.subr.bf16.mxu0 0
      %471 = vmatpush1.bf16.xpose.msra.mxu0 0
      %472 = vmatprep.subr.bf16.mxu0 0
      %473 = vmatpush1.bf16.xpose.msra.mxu0 0
      %474 = vmatprep.subr.bf16.mxu0 0
      %475 = vmatpush1.bf16.xpose.msra.mxu0 0
      %476 = vmatprep.subr.bf16.mxu0 0
      %477 = vmatpush1.bf16.xpose.msra.mxu0 0
      %478 = vmatprep.subr.bf16.mxu0 0
      %479 = vmatpush1.bf16.xpose.msra.mxu0 %v462
      %480 = vmatprep.subr.bf16.mxu0 0
      %481 = vmatpush2.bf16.xpose.msra.mxu0 0
      %482 = vmatprep.subr.bf16.mxu0 0
      %483 = vmatpush2.bf16.xpose.msra.mxu0 0
      %484 = vmatprep.subr.bf16.mxu0 0
      %485 = vmatpush2.bf16.xpose.msra.mxu0 0
      %486 = vmatprep.subr.bf16.mxu0 0
      %487 = vmatpush2.bf16.xpose.msra.mxu0 0
      %488 = vmatprep.subr.bf16.mxu0 0
      %489 = vmatpush2.bf16.xpose.msra.mxu0 0
      %490 = vmatprep.subr.bf16.mxu0 0
      %491 = vmatpush2.bf16.xpose.msra.mxu0 0
      %492 = vmatprep.subr.bf16.mxu0 0
      %493 = vmatpush2.bf16.xpose.msra.mxu0 0
      %494 = vmatprep.subr.bf16.mxu0 0
      %495 = vmatpush2.bf16.xpose.msra.mxu0 0
      %496 = vmatprep.mubr.bf16.mxu0 0
      %497 = vmatmul.mubr.bf16.gmra.mxu0 %v459
      %v498 = vpop.f32.mrf.mxu0
      %v499 = vadd.f32 0.0, %v498
      %v500 = vpop.f32.mrf.mxu0
      %v501 = vpop.f32.mrf.mxu0
      %v502 = vpop.f32.mrf.mxu0
      %503 = vdwg.mxu0
      %v504 = vmul.f32 %v499, 0.35355338
      %v505 = vsel %vm265, %v504, -1e+30
      %v506 = vsel %vm267, %v505, -inf
      %507 = vmax.xlane.f32.xlu0 %v506
      %v508 = vpop.xlane.xlu0 %507
      %v509 = vsub.f32 %v505, %v508
      %v510 = vmul.f32 %v509, 1.442695
      %v511 = vpow.pop %v510
      %v512 = vsel %vm267, %v511, 0.0
      %513 = vadd.xlane.f32.xlu0 %v512
      %v514 = vpop.xlane.xlu0 %513
      %v515 = vpack.c.bf16 %v511, %v511
      %516 = vrot.lane.b32.xlu0 %v451, 80
      %v517 = vpop.permute.xlu0 %516
      %v520 = vsel %vm267, %v515, 0
      %522 = vmatprep.subr.bf16.mxu0 0
      %523 = vmatpush1.bf16.msra.mxu0 0
      %524 = vmatprep.subr.bf16.mxu0 0
      %525 = vmatpush1.bf16.msra.mxu0 0
      %526 = vmatprep.subr.bf16.mxu0 0
      %527 = vmatpush1.bf16.msra.mxu0 0
      %528 = vmatprep.subr.bf16.mxu0 0
      %529 = vmatpush1.bf16.msra.mxu0 0
      %530 = vmatprep.subr.bf16.mxu0 0
      %531 = vmatpush1.bf16.msra.mxu0 0
      %532 = vmatprep.subr.bf16.mxu0 0
      %533 = vmatpush1.bf16.msra.mxu0 0
      %534 = vmatprep.subr.bf16.mxu0 0
      %535 = vmatpush1.bf16.msra.mxu0 0
      %536 = vmatprep.subr.bf16.mxu0 0
      %537 = vmatpush1.bf16.msra.mxu0 %v517
      %538 = vmatprep.subr.bf16.mxu0 0
      %539 = vmatpush2.bf16.msra.mxu0 0
      %540 = vmatprep.subr.bf16.mxu0 0
      %541 = vmatpush2.bf16.msra.mxu0 0
      %542 = vmatprep.subr.bf16.mxu0 0
      %543 = vmatpush2.bf16.msra.mxu0 0
      %544 = vmatprep.subr.bf16.mxu0 0
      %545 = vmatpush2.bf16.msra.mxu0 0
      %546 = vmatprep.subr.bf16.mxu0 0
      %547 = vmatpush2.bf16.msra.mxu0 0
      %548 = vmatprep.subr.bf16.mxu0 0
      %549 = vmatpush2.bf16.msra.mxu0 0
      %550 = vmatprep.subr.bf16.mxu0 0
      %551 = vmatpush2.bf16.msra.mxu0 0
      %552 = vmatprep.subr.bf16.mxu0 0
      %553 = vmatpush2.bf16.msra.mxu0 0
      %554 = vmatprep.mubr.bf16.mxu0 0
      %555 = vmatmul.mubr.bf16.gmra.mxu0 %v520
      %v556 = vpop.f32.mrf.mxu0
      %v557 = vadd.f32 0.0, %v556
      %v558 = vpop.f32.mrf.mxu0
      %v559 = vpop.f32.mrf.mxu0
      %v560 = vpop.f32.mrf.mxu0
      %561 = vdwg.mxu0
      %v562 = vrcp.pop %v514
      %v563 = vmul.f32 %v557, %v562
      %s564 = scalar_lea.vmem %s204, 16
      %565 = vst.msk [vmem:[%s564] sm:$0xff] %vm215, %v563
      %v566 = vld [vmem:[%s190] sm:$0xff]
      %v567 = vpack.c.bf16 %v566, %v566
      %v568 = vld [vmem:[%s195] sm:$0xff]
      %v569 = vld [vmem:[%s195 + $0x8] sm:$0xff]
      %v570 = vpack.c.bf16 %v569, %v568
      %572 = vrot.lane.b32.xlu0 %v567, 104
      %v573 = vpop.permute.xlu0 %572
      %575 = vrot.lane.b32.xlu0 %v570, 104
      %v576 = vpop.permute.xlu0 %575
      %v578 = vsel %vm215, %v573, 0
      %v581 = vsel %vm215, %v576, 0
      %583 = vmatprep.subr.bf16.mxu0 0
      %584 = vmatpush1.bf16.xpose.msra.mxu0 0
      %585 = vmatprep.subr.bf16.mxu0 0
      %586 = vmatpush1.bf16.xpose.msra.mxu0 0
      %587 = vmatprep.subr.bf16.mxu0 0
      %588 = vmatpush1.bf16.xpose.msra.mxu0 0
      %589 = vmatprep.subr.bf16.mxu0 0
      %590 = vmatpush1.bf16.xpose.msra.mxu0 0
      %591 = vmatprep.subr.bf16.mxu0 0
      %592 = vmatpush1.bf16.xpose.msra.mxu0 0
      %593 = vmatprep.subr.bf16.mxu0 0
      %594 = vmatpush1.bf16.xpose.msra.mxu0 0
      %595 = vmatprep.subr.bf16.mxu0 0
      %596 = vmatpush1.bf16.xpose.msra.mxu0 0
      %597 = vmatprep.subr.bf16.mxu0 0
      %598 = vmatpush1.bf16.xpose.msra.mxu0 %v581
      %599 = vmatprep.subr.bf16.mxu0 0
      %600 = vmatpush2.bf16.xpose.msra.mxu0 0
      %601 = vmatprep.subr.bf16.mxu0 0
      %602 = vmatpush2.bf16.xpose.msra.mxu0 0
      %603 = vmatprep.subr.bf16.mxu0 0
      %604 = vmatpush2.bf16.xpose.msra.mxu0 0
      %605 = vmatprep.subr.bf16.mxu0 0
      %606 = vmatpush2.bf16.xpose.msra.mxu0 0
      %607 = vmatprep.subr.bf16.mxu0 0
      %608 = vmatpush2.bf16.xpose.msra.mxu0 0
      %609 = vmatprep.subr.bf16.mxu0 0
      %610 = vmatpush2.bf16.xpose.msra.mxu0 0
      %611 = vmatprep.subr.bf16.mxu0 0
      %612 = vmatpush2.bf16.xpose.msra.mxu0 0
      %613 = vmatprep.subr.bf16.mxu0 0
      %614 = vmatpush2.bf16.xpose.msra.mxu0 0
      %615 = vmatprep.mubr.bf16.mxu0 0
      %616 = vmatmul.mubr.bf16.gmra.mxu0 %v578
      %v617 = vpop.f32.mrf.mxu0
      %v618 = vadd.f32 0.0, %v617
      %v619 = vpop.f32.mrf.mxu0
      %v620 = vpop.f32.mrf.mxu0
      %v621 = vpop.f32.mrf.mxu0
      %622 = vdwg.mxu0
      %v623 = vmul.f32 %v618, 0.35355338
      %v624 = vsel %vm265, %v623, -1e+30
      %v625 = vsel %vm267, %v624, -inf
      %626 = vmax.xlane.f32.xlu0 %v625
      %v627 = vpop.xlane.xlu0 %626
      %v628 = vsub.f32 %v624, %v627
      %v629 = vmul.f32 %v628, 1.442695
      %v630 = vpow.pop %v629
      %v631 = vsel %vm267, %v630, 0.0
      %632 = vadd.xlane.f32.xlu0 %v631
      %v633 = vpop.xlane.xlu0 %632
      %v634 = vpack.c.bf16 %v630, %v630
      %635 = vrot.lane.b32.xlu0 %v570, 72
      %v636 = vpop.permute.xlu0 %635
      %v639 = vsel %vm267, %v634, 0
      %641 = vmatprep.subr.bf16.mxu0 0
      %642 = vmatpush1.bf16.msra.mxu0 0
      %643 = vmatprep.subr.bf16.mxu0 0
      %644 = vmatpush1.bf16.msra.mxu0 0
      %645 = vmatprep.subr.bf16.mxu0 0
      %646 = vmatpush1.bf16.msra.mxu0 0
      %647 = vmatprep.subr.bf16.mxu0 0
      %648 = vmatpush1.bf16.msra.mxu0 0
      %649 = vmatprep.subr.bf16.mxu0 0
      %650 = vmatpush1.bf16.msra.mxu0 0
      %651 = vmatprep.subr.bf16.mxu0 0
      %652 = vmatpush1.bf16.msra.mxu0 0
      %653 = vmatprep.subr.bf16.mxu0 0
      %654 = vmatpush1.bf16.msra.mxu0 0
      %655 = vmatprep.subr.bf16.mxu0 0
      %656 = vmatpush1.bf16.msra.mxu0 %v636
      %657 = vmatprep.subr.bf16.mxu0 0
      %658 = vmatpush2.bf16.msra.mxu0 0
      %659 = vmatprep.subr.bf16.mxu0 0
      %660 = vmatpush2.bf16.msra.mxu0 0
      %661 = vmatprep.subr.bf16.mxu0 0
      %662 = vmatpush2.bf16.msra.mxu0 0
      %663 = vmatprep.subr.bf16.mxu0 0
      %664 = vmatpush2.bf16.msra.mxu0 0
      %665 = vmatprep.subr.bf16.mxu0 0
      %666 = vmatpush2.bf16.msra.mxu0 0
      %667 = vmatprep.subr.bf16.mxu0 0
      %668 = vmatpush2.bf16.msra.mxu0 0
      %669 = vmatprep.subr.bf16.mxu0 0
      %670 = vmatpush2.bf16.msra.mxu0 0
      %671 = vmatprep.subr.bf16.mxu0 0
      %672 = vmatpush2.bf16.msra.mxu0 0
      %673 = vmatprep.mubr.bf16.mxu0 0
      %674 = vmatmul.mubr.bf16.gmra.mxu0 %v639
      %v675 = vpop.f32.mrf.mxu0
      %v676 = vadd.f32 0.0, %v675
      %v677 = vpop.f32.mrf.mxu0
      %v678 = vpop.f32.mrf.mxu0
      %v679 = vpop.f32.mrf.mxu0
      %680 = vdwg.mxu0
      %v681 = vrcp.pop %v633
      %v682 = vmul.f32 %v676, %v681
      %s683 = scalar_lea.vmem %s204, 24
      %684 = vst.msk [vmem:[%s683] sm:$0xff] %vm215, %v682
      %p685 = scmp.lt.s32.totalorder %s14, 1
      %s686 = scalar_select %p685, %s14, 1
      %s687 = smul.addr %s686, 4
      %s688 = smul.addr %s687, 8
      %s689 = scalar_lea.vmem %s3, %s688
      // Predicated region
      $region33: #{attention_forward.6} parent=31 // pred_check
        %p690 = pneg %p110
      $region34: #{attention_forward.6} parent=31 // pred_check_branch
        %692 = sbr.rel (%p690) target = $region36
      $region35: #{attention_forward.6} parent=31 // pred_region
        _
      $region36: #{attention_forward.6} parent=31 // pred_fallthru
        _
    $region32: #{attention_forward.6} parent=5 // pred_fallthru
      _
    %p693 = scmp.le.s32.totalorder 2, %s9
    // Predicated region
    $region37: #{attention_forward.6} parent=5 // pred_check
      %p694 = pneg %p693
    $region38: #{attention_forward.6} parent=5 // pred_check_branch
      %696 = sbr.rel (%p694) target = $region40
    $region39: #{attention_forward.6} parent=5 // pred_region
      %s697 = ssub.s32 %s9, 2
      // Predicated region
      $region41: #{attention_forward.6} parent=39 // pred_check
        %p698 = pneg %p116
      $region42: #{attention_forward.6} parent=39 // pred_check_branch
        %700 = sbr.rel (%p698) target = $region44
      $region43: #{attention_forward.6} parent=39 // pred_region
        %p701 = scmp.lt.s32.totalorder %s15, 1
        %s702 = scalar_select %p701, %s15, 1
        %s703 = smul.addr %s702, 4
        %s704 = smul.addr %s703, 8
        %s705 = scalar_lea.vmem %s3, %s704
      $region44: #{attention_forward.6} parent=39 // pred_fallthru
        _
    $region40: #{attention_forward.6} parent=5 // pred_fallthru
      _
  $region6: #{attention_forward.6} parent=0 // loop_footer
    %s13 = sadd.s32 1, %s9
  $region7: #{attention_forward.6} parent=0 // loop_footer_branch
    %8 = sbr.rel target = $region3
  $region8: #{attention_forward.6} parent=0 // loop_exit
    _

</llo_original>
